<compile_context>
chip_gen: v6e
topology: v6e:2x2x1
jax: 0.10.0
libtpu: 0.0.40
codegen_flags: <defaults>
</compile_context>

<pallas_src>
import functools
import math

import jax
import jax.numpy as jnp
from jax.experimental import pallas as pl
from jax.experimental.pallas import tpu as pltpu


def _attend_and_project(Q, K, V, mask, wo, bo, *, h: int, d_k: int):
    """Head-batched scaled-dot-product attention + output projection.

    Q, K, V: (S, D) float32 (already projected).  mask: (1, S) float32.
    wo: (D, D) bfloat16, bo: (1, D) float32.  Returns (S, D) float32.
    """
    S = Q.shape[0]
    scale = jnp.float32(1.0 / math.sqrt(d_k))

    # Mask bias computed once (f32), broadcast over heads and query rows.
    neg_bias = jnp.where(mask == 0, jnp.float32(-1e9), jnp.float32(0.0))  # (1, S)

    # Head-batched views (h, S, d_k); fold the softmax scale into Q (smaller
    # tensor than the (h, S, S) scores).
    Qh = jnp.transpose((Q * scale).reshape(S, h, d_k), (1, 0, 2)).astype(jnp.bfloat16)
    Kh = jnp.transpose(K.reshape(S, h, d_k), (1, 0, 2)).astype(jnp.bfloat16)
    Vh = jnp.transpose(V.reshape(S, h, d_k), (1, 0, 2)).astype(jnp.bfloat16)

    # Scores for all heads in one batched matmul (f32 accumulation).
    scores = jnp.einsum("hqd,hkd->hqk", Qh, Kh,
                        preferred_element_type=jnp.float32)          # (h, S, S)
    scores = scores + neg_bias[None, :, :]

    # Softmax in f32; denominator reciprocal goes to the EUP.
    m = jnp.max(scores, axis=-1, keepdims=True)
    e = jnp.exp(scores - m)
    denom = jnp.sum(e, axis=-1, keepdims=True)
    p = e * pl.reciprocal(denom, approx=True)                        # (h, S, S)

    # Context for all heads in one batched matmul, then head concat via a
    # single transpose+reshape back to a lane-dense (S, D) slab.
    ctx = jnp.einsum("hqk,hkd->hqd", p.astype(jnp.bfloat16), Vh,
                     preferred_element_type=jnp.float32)             # (h, S, d_k)
    ctx = jnp.transpose(ctx, (1, 0, 2)).reshape(S, h * d_k)          # (S, D)

    out = jnp.dot(ctx.astype(jnp.bfloat16), wo,
                  preferred_element_type=jnp.float32) + bo
    return out


def _mha_self_kernel(x_ref, mask_ref, wqkv_ref, bqkv_ref, wo_ref, bo_ref,
                     o_ref, *, h: int, d_k: int):
    """Self-attention path: one fused (S, D) x (D, 3D) QKV projection."""
    D = h * d_k
    x = x_ref[0]                     # (S, D) bf16
    mask = mask_ref[0]               # (1, S) f32

    qkv = jnp.dot(x, wqkv_ref[...],
                  preferred_element_type=jnp.float32) + bqkv_ref[...]   # (S, 3D) f32
    Q = qkv[:, 0 * D:1 * D]
    K = qkv[:, 1 * D:2 * D]
    V = qkv[:, 2 * D:3 * D]

    out = _attend_and_project(Q, K, V, mask, wo_ref[...], bo_ref[...], h=h, d_k=d_k)
    o_ref[0] = out.astype(o_ref.dtype)


def _mha_cross_kernel(q_ref, k_ref, v_ref, mask_ref,
                      wq_ref, bq_ref, wk_ref, bk_ref, wv_ref, bv_ref,
                      wo_ref, bo_ref, o_ref, *, h: int, d_k: int):
    """General path: distinct query / key / value tensors."""
    mask = mask_ref[0]               # (1, S) f32
    Q = jnp.dot(q_ref[0], wq_ref[...], preferred_element_type=jnp.float32) + bq_ref[...]
    K = jnp.dot(k_ref[0], wk_ref[...], preferred_element_type=jnp.float32) + bk_ref[...]
    V = jnp.dot(v_ref[0], wv_ref[...], preferred_element_type=jnp.float32) + bv_ref[...]

    out = _attend_and_project(Q, K, V, mask, wo_ref[...], bo_ref[...], h=h, d_k=d_k)
    o_ref[0] = out.astype(o_ref.dtype)


def multi_head_attention(q, k, v, mask, params, *, h: int):
    """q, k, v: (B, S, D) f32; mask: (B, 1, S) f32; params dict of weights."""
    B, S, D = q.shape
    assert D % h == 0
    d_k = D // h
    bf16 = jnp.bfloat16

    seq_spec = pl.BlockSpec((1, S, D), lambda b: (b, 0, 0))
    mask_spec = pl.BlockSpec((1, 1, S), lambda b: (b, 0, 0))

    def const_spec(shape):
        # Constant block index -> weights DMAed once, not per batch step.
        return pl.BlockSpec(shape, lambda b: (0,) * len(shape))

    compiler_params = pltpu.CompilerParams(
        dimension_semantics=("parallel",),
        # Cap scoped VMEM so the same config fits v7x (64 MiB physical) as
        # well as v5e/v6e (128 MiB).
        vmem_limit_bytes=32 * 1024 * 1024,
    )

    wo = params["wo"].astype(bf16)
    bo = params["bo"].astype(jnp.float32)

    self_attention = (q is k) and (k is v)
    if self_attention:
        # Fused (D, 3D) QKV weight / (1, 3D) bias built wrapper-side.
        w_qkv = jnp.concatenate(
            [params["wq"], params["wk"], params["wv"]], axis=1).astype(bf16)
        b_qkv = jnp.concatenate(
            [params["bq"], params["bk"], params["bv"]], axis=1).astype(jnp.float32)
        kernel = functools.partial(_mha_self_kernel, h=h, d_k=d_k)
        return pl.pallas_call(
            kernel,
            out_shape=jax.ShapeDtypeStruct((B, S, D), jnp.float32),
            grid_spec=pltpu.PrefetchScalarGridSpec(
                num_scalar_prefetch=0,
                grid=(B,),
                in_specs=[seq_spec, mask_spec,
                          const_spec((D, 3 * D)), const_spec((1, 3 * D)),
                          const_spec((D, D)), const_spec((1, D))],
                out_specs=seq_spec,
            ),
            compiler_params=compiler_params,
        )(q.astype(bf16), mask, w_qkv, b_qkv, wo, bo)

    kernel = functools.partial(_mha_cross_kernel, h=h, d_k=d_k)
    return pl.pallas_call(
        kernel,
        out_shape=jax.ShapeDtypeStruct((B, S, D), jnp.float32),
        grid_spec=pltpu.PrefetchScalarGridSpec(
            num_scalar_prefetch=0,
            grid=(B,),
            in_specs=[seq_spec, seq_spec, seq_spec, mask_spec,
                      const_spec((D, D)), const_spec((1, D)),   # Wq, bq
                      const_spec((D, D)), const_spec((1, D)),   # Wk, bk
                      const_spec((D, D)), const_spec((1, D)),   # Wv, bv
                      const_spec((D, D)), const_spec((1, D))],  # Wo, bo
            out_specs=seq_spec,
        ),
        compiler_params=compiler_params,
    )(q.astype(bf16), k.astype(bf16), v.astype(bf16), mask,
      params["wq"].astype(bf16), params["bq"].astype(jnp.float32),
      params["wk"].astype(bf16), params["bk"].astype(jnp.float32),
      params["wv"].astype(bf16), params["bv"].astype(jnp.float32),
      wo, bo)


def _reference(q, k, v, mask, params, *, h: int):
    """Pure-JAX f32 reference mirroring the PyTorch forward (eval mode)."""
    B, S, D = q.shape
    d_k = D // h

    def lin(x, w, b):
        return x @ w + b  # w already (in, out)

    Q = lin(q, params["wq"], params["bq"]).reshape(B, S, h, d_k).transpose(0, 2, 1, 3)
    K = lin(k, params["wk"], params["bk"]).reshape(B, S, h, d_k).transpose(0, 2, 1, 3)
    V = lin(v, params["wv"], params["bv"]).reshape(B, S, h, d_k).transpose(0, 2, 1, 3)
    scores = jnp.einsum("bhqd,bhkd->bhqk", Q, K) / math.sqrt(d_k)
    scores = jnp.where(mask[:, None, :, :] == 0, -1e9, scores)
    p = jax.nn.softmax(scores, axis=-1)
    ctx = jnp.einsum("bhqk,bhkd->bhqd", p, V)
    ctx = ctx.transpose(0, 2, 1, 3).reshape(B, S, D)
    return lin(ctx, params["wo"], params["bo"])


if __name__ == "__main__":
    B, S, D, H = 2, 8, 32, 4

    key = jax.random.PRNGKey(0)
    keys = jax.random.split(key, 12)

    # Deterministic synthetic parameters (Linear weights stored as (in, out)).
    bound = 1.0 / math.sqrt(D)

    def u(kk, shape):
        return jax.random.uniform(kk, shape, jnp.float32, -bound, bound)

    params = {
        "wq": u(keys[0], (D, D)), "bq": u(keys[1], (1, D)),
        "wk": u(keys[2], (D, D)), "bk": u(keys[3], (1, D)),
        "wv": u(keys[4], (D, D)), "bv": u(keys[5], (1, D)),
        "wo": u(keys[6], (D, D)), "bo": u(keys[7], (1, D)),
    }

    x = jax.random.normal(keys[8], (B, S, D), jnp.float32)
    k_in = jax.random.normal(keys[9], (B, S, D), jnp.float32)
    v_in = jax.random.normal(keys[10], (B, S, D), jnp.float32)

    # Mask: (B, 1, S); batch 1 has its last two key positions masked out.
    mask = jnp.ones((B, 1, S), jnp.float32)
    mask = mask.at[1, 0, S - 2:].set(0.0)

    # bf16 MXU inputs => loosened tolerance vs the f32 reference (expected).
    TOL = dict(atol=5e-2, rtol=5e-2)

    # 1) Self-attention hot path (SITS-BERT usage): fused QKV kernel.
    out_self = jax.block_until_ready(multi_head_attention(x, x, x, mask, params, h=H))
    ref_self = _reference(x, x, x, mask, params, h=H)
    assert out_self.shape == (B, S, D)
    assert jnp.allclose(out_self, ref_self, **TOL), "self-attention mismatch vs reference"

    # 2) General path with distinct query / key / value tensors.
    out_cross = jax.block_until_ready(
        multi_head_attention(x, k_in, v_in, mask, params, h=H))
    ref_cross = _reference(x, k_in, v_in, mask, params, h=H)
    assert out_cross.shape == (B, S, D)
    assert jnp.allclose(out_cross, ref_cross, **TOL), "cross-attention mismatch vs reference"

    print("KERNEL_OK")
</pallas_src>

<mosaic_0001>
module attributes {stable_mosaic.version = 11 : i64} {
  func.func @_mha_self_kernel(%arg0: i32, %arg1: memref<1x8x32xbf16, #tpu.memory_space<vmem>>, %arg2: memref<1x1x8xf32, #tpu.memory_space<vmem>>, %arg3: memref<32x96xbf16, #tpu.memory_space<vmem>>, %arg4: memref<1x96xf32, #tpu.memory_space<vmem>>, %arg5: memref<32x32xbf16, #tpu.memory_space<vmem>>, %arg6: memref<1x32xf32, #tpu.memory_space<vmem>>, %arg7: memref<1x8x32xf32, #tpu.memory_space<vmem>>) attributes {dimension_semantics = [#tpu.dimension_semantics<parallel>], iteration_bounds = array<i64: 2>, scalar_prefetch = 0 : i64, scratch_operands = 0 : i64, tpu.core_type = #tpu.core_type<tc>, window_params = [{transform_indices = @transform_0, window_bounds = array<i64: 1, 8, 32>}, {transform_indices = @transform_1, window_bounds = array<i64: 1, 1, 8>}, {pipeline_mode = #tpu.pipeline_mode<synchronous>, transform_indices = @transform_2, window_bounds = array<i64: 32, 96>}, {pipeline_mode = #tpu.pipeline_mode<synchronous>, transform_indices = @transform_3, window_bounds = array<i64: 1, 96>}, {pipeline_mode = #tpu.pipeline_mode<synchronous>, transform_indices = @transform_4, window_bounds = array<i64: 32, 32>}, {pipeline_mode = #tpu.pipeline_mode<synchronous>, transform_indices = @transform_5, window_bounds = array<i64: 1, 32>}, {transform_indices = @transform_6, window_bounds = array<i64: 1, 8, 32>}]} {
    %c0 = arith.constant 0 : index
    %c0_0 = arith.constant 0 : index
    %c0_1 = arith.constant 0 : index
    %0 = vector.load %arg1[%c0, %c0_0, %c0_1] : memref<1x8x32xbf16, #tpu.memory_space<vmem>>, vector<1x8x32xbf16>
    %1 = vector.shape_cast %0 : vector<1x8x32xbf16> to vector<8x32xbf16>
    %c0_2 = arith.constant 0 : index
    %c0_3 = arith.constant 0 : index
    %c0_4 = arith.constant 0 : index
    %2 = vector.load %arg2[%c0_2, %c0_3, %c0_4] : memref<1x1x8xf32, #tpu.memory_space<vmem>>, vector<1x1x8xf32>
    %3 = vector.shape_cast %2 : vector<1x1x8xf32> to vector<1x8xf32>
    %c0_5 = arith.constant 0 : index
    %c0_6 = arith.constant 0 : index
    %4 = vector.load %arg3[%c0_5, %c0_6] : memref<32x96xbf16, #tpu.memory_space<vmem>>, vector<32x96xbf16>
    %cst = arith.constant dense<0.000000e+00> : vector<8x96xf32>
    %5 = tpu.matmul %1, %4, %cst {dimension_numbers = #tpu.dot_dimension_numbers<[1], [0], [0], [1], [0, 0, 1, 1], [], []>} : vector<8x32xbf16>, vector<32x96xbf16>, vector<8x96xf32> -> vector<8x96xf32>
    %c0_7 = arith.constant 0 : index
    %c0_8 = arith.constant 0 : index
    %6 = vector.load %arg4[%c0_7, %c0_8] : memref<1x96xf32, #tpu.memory_space<vmem>>, vector<1x96xf32>
    %7 = vector.broadcast %6 : vector<1x96xf32> to vector<8x96xf32>
    %8 = arith.addf %5, %7 : vector<8x96xf32>
    %9 = vector.extract_strided_slice %8 {offsets = [0, 0], sizes = [8, 32], strides = [1, 1]} : vector<8x96xf32> to vector<8x32xf32>
    %10 = vector.extract_strided_slice %8 {offsets = [0, 32], sizes = [8, 32], strides = [1, 1]} : vector<8x96xf32> to vector<8x32xf32>
    %11 = vector.extract_strided_slice %8 {offsets = [0, 64], sizes = [8, 32], strides = [1, 1]} : vector<8x96xf32> to vector<8x32xf32>
    %c0_9 = arith.constant 0 : index
    %c0_10 = arith.constant 0 : index
    %12 = vector.load %arg5[%c0_9, %c0_10] : memref<32x32xbf16, #tpu.memory_space<vmem>>, vector<32x32xbf16>
    %c0_11 = arith.constant 0 : index
    %c0_12 = arith.constant 0 : index
    %13 = vector.load %arg6[%c0_11, %c0_12] : memref<1x32xf32, #tpu.memory_space<vmem>>, vector<1x32xf32>
    %cst_13 = arith.constant 0.000000e+00 : f32
    %14 = vector.broadcast %cst_13 : f32 to vector<1x8xf32>
    %15 = arith.cmpf oeq, %3, %14 : vector<1x8xf32>
    %cst_14 = arith.constant -1.000000e+09 : f32
    %cst_15 = arith.constant 0.000000e+00 : f32
    %16 = vector.broadcast %cst_14 : f32 to vector<1x8xf32>
    %17 = vector.broadcast %cst_15 : f32 to vector<1x8xf32>
    %18 = arith.select %15, %16, %17 : vector<1x8xi1>, vector<1x8xf32>
    %cst_16 = arith.constant 0.353553385 : f32
    %19 = vector.broadcast %cst_16 : f32 to vector<8x32xf32>
    %20 = arith.mulf %9, %19 : vector<8x32xf32>
    %21 = vector.shape_cast %20 : vector<8x32xf32> to vector<8x4x8xf32>
    %22 = tpu.transpose %21, [1, 0, 2] : vector<8x4x8xf32> -> vector<4x8x8xf32>
    %23 = arith.truncf %22 : vector<4x8x8xf32> to vector<4x8x8xbf16>
    %24 = vector.shape_cast %10 : vector<8x32xf32> to vector<8x4x8xf32>
    %25 = tpu.transpose %24, [1, 0, 2] : vector<8x4x8xf32> -> vector<4x8x8xf32>
    %26 = arith.truncf %25 : vector<4x8x8xf32> to vector<4x8x8xbf16>
    %27 = vector.shape_cast %11 : vector<8x32xf32> to vector<8x4x8xf32>
    %28 = tpu.transpose %27, [1, 0, 2] : vector<8x4x8xf32> -> vector<4x8x8xf32>
    %29 = arith.truncf %28 : vector<4x8x8xf32> to vector<4x8x8xbf16>
    "tpu.trace_start"() <{level = 10 : i32, message = "hqd,hkd->hqk"}> : () -> ()
    %cst_17 = arith.constant dense<0.000000e+00> : vector<4x8x8xf32>
    %30 = tpu.matmul %23, %26, %cst_17 {dimension_numbers = #tpu.dot_dimension_numbers<[2], [2], [1], [1], [0, 0, 0, 1, 1, 1], [0], [0]>} : vector<4x8x8xbf16>, vector<4x8x8xbf16>, vector<4x8x8xf32> -> vector<4x8x8xf32>
    "tpu.trace_stop"() : () -> ()
    %31 = vector.shape_cast %18 : vector<1x8xf32> to vector<1x1x8xf32>
    %32 = vector.broadcast %31 : vector<1x1x8xf32> to vector<4x8x8xf32>
    %33 = arith.addf %30, %32 : vector<4x8x8xf32>
    %cst_18 = arith.constant dense<0xFF800000> : vector<4x8xf32>
    %34 = vector.multi_reduction <maximumf>, %33, %cst_18 [2] : vector<4x8x8xf32> to vector<4x8xf32>
    %35 = vector.shape_cast %34 : vector<4x8xf32> to vector<4x8x1xf32>
    %36 = vector.broadcast %35 : vector<4x8x1xf32> to vector<4x8x8xf32>
    %37 = arith.subf %33, %36 : vector<4x8x8xf32>
    %38 = math.exp %37 : vector<4x8x8xf32>
    %cst_19 = arith.constant dense<0.000000e+00> : vector<4x8xf32>
    %39 = vector.multi_reduction <add>, %38, %cst_19 [2] : vector<4x8x8xf32> to vector<4x8xf32>
    %40 = vector.shape_cast %39 : vector<4x8xf32> to vector<4x8x1xf32>
    %41 = tpu.reciprocal %40 {approx = true} : vector<4x8x1xf32> -> vector<4x8x1xf32>
    %42 = vector.broadcast %41 : vector<4x8x1xf32> to vector<4x8x8xf32>
    %43 = arith.mulf %38, %42 : vector<4x8x8xf32>
    %44 = arith.truncf %43 : vector<4x8x8xf32> to vector<4x8x8xbf16>
    "tpu.trace_start"() <{level = 10 : i32, message = "hqk,hkd->hqd"}> : () -> ()
    %cst_20 = arith.constant dense<0.000000e+00> : vector<4x8x8xf32>
    %45 = tpu.matmul %44, %29, %cst_20 {dimension_numbers = #tpu.dot_dimension_numbers<[2], [1], [1], [2], [0, 0, 0, 1, 1, 2], [0], [0]>} : vector<4x8x8xbf16>, vector<4x8x8xbf16>, vector<4x8x8xf32> -> vector<4x8x8xf32>
    "tpu.trace_stop"() : () -> ()
    %46 = tpu.transpose %45, [1, 0, 2] : vector<4x8x8xf32> -> vector<8x4x8xf32>
    %47 = vector.shape_cast %46 : vector<8x4x8xf32> to vector<8x32xf32>
    %48 = arith.truncf %47 : vector<8x32xf32> to vector<8x32xbf16>
    %cst_21 = arith.constant dense<0.000000e+00> : vector<8x32xf32>
    %49 = tpu.matmul %48, %12, %cst_21 {dimension_numbers = #tpu.dot_dimension_numbers<[1], [0], [0], [1], [0, 0, 1, 1], [], []>} : vector<8x32xbf16>, vector<32x32xbf16>, vector<8x32xf32> -> vector<8x32xf32>
    %50 = vector.broadcast %13 : vector<1x32xf32> to vector<8x32xf32>
    %51 = arith.addf %49, %50 : vector<8x32xf32>
    %c0_22 = arith.constant 0 : index
    %c0_23 = arith.constant 0 : index
    %c0_24 = arith.constant 0 : index
    %52 = vector.load %arg7[%c0_22, %c0_23, %c0_24] : memref<1x8x32xf32, #tpu.memory_space<vmem>>, vector<1x8x32xf32>
    %53 = vector.shape_cast %52 : vector<1x8x32xf32> to vector<8x32xf32>
    %54 = vector.shape_cast %51 : vector<8x32xf32> to vector<1x8x32xf32>
    tpu.vector_store %arg7[%c0_22, %c0_23, %c0_24], %54 {strides = array<i32>} : memref<1x8x32xf32, #tpu.memory_space<vmem>>, vector<1x8x32xf32>,
    return
  }
  func.func @transform_0(%arg0: i32) -> (i32, i32, i32) {
    %c0_i32 = arith.constant 0 : i32
    %c0_i32_0 = arith.constant 0 : i32
    %c0_i32_1 = arith.constant 0 : i32
    return %arg0, %c0_i32, %c0_i32_0 : i32, i32, i32
  }
  func.func @transform_1(%arg0: i32) -> (i32, i32, i32) {
    %c0_i32 = arith.constant 0 : i32
    %c0_i32_0 = arith.constant 0 : i32
    %c0_i32_1 = arith.constant 0 : i32
    return %arg0, %c0_i32, %c0_i32_0 : i32, i32, i32
  }
  func.func @transform_2(%arg0: i32) -> (i32, i32) {
    %c0_i32 = arith.constant 0 : i32
    %c0_i32_0 = arith.constant 0 : i32
    %c0_i32_1 = arith.constant 0 : i32
    return %c0_i32, %c0_i32_0 : i32, i32
  }
  func.func @transform_3(%arg0: i32) -> (i32, i32) {
    %c0_i32 = arith.constant 0 : i32
    %c0_i32_0 = arith.constant 0 : i32
    %c0_i32_1 = arith.constant 0 : i32
    return %c0_i32, %c0_i32_0 : i32, i32
  }
  func.func @transform_4(%arg0: i32) -> (i32, i32) {
    %c0_i32 = arith.constant 0 : i32
    %c0_i32_0 = arith.constant 0 : i32
    %c0_i32_1 = arith.constant 0 : i32
    return %c0_i32, %c0_i32_0 : i32, i32
  }
  func.func @transform_5(%arg0: i32) -> (i32, i32) {
    %c0_i32 = arith.constant 0 : i32
    %c0_i32_0 = arith.constant 0 : i32
    %c0_i32_1 = arith.constant 0 : i32
    return %c0_i32, %c0_i32_0 : i32, i32
  }
  func.func @transform_6(%arg0: i32) -> (i32, i32, i32) {
    %c0_i32 = arith.constant 0 : i32
    %c0_i32_0 = arith.constant 0 : i32
    %c0_i32_1 = arith.constant 0 : i32
    return %arg0, %c0_i32, %c0_i32_0 : i32, i32, i32
  }
}

</mosaic_0001>

<llo_original>
// kernel: tpu_custom_call.1
$region0: #{tpu_custom_call.1}
  #allocation0 [shape = 'u32[]', space=smem, size = 0x4, offset = 0x4, fixed_abs, tag = 'smem constant byte address 0x4 - core index']
  #allocation1 [shape = 'u32[144,128]{1,0:T(1,128)}', space=vmem, size = 0x12000, scoped, tag = 'internal scratch']
  %s0 = inlined_call_operand.hbm [shape: bf16[2,8,32], index: 0, kind: input, shape index: {}]
  %s1 = inlined_call_operand.hbm [shape: f32[2,1,8], index: 1, kind: input, shape index: {}]
  %s2 = inlined_call_operand.hbm [shape: bf16[32,96], index: 2, kind: input, shape index: {}]
  %s3 = inlined_call_operand.vmem [shape: f32[1,96], index: 3, kind: input, shape index: {}]
  %s4 = inlined_call_operand.hbm [shape: bf16[32,32], index: 4, kind: input, shape index: {}]
  %s5 = inlined_call_operand.vmem [shape: f32[1,32], index: 5, kind: input, shape index: {}]
  %s6 = inlined_call_operand.hbm [shape: f32[2,8,32], index: 6, kind: output, shape index: {}]
  %s7 = sld [smem:[#allocation0]]
  $region73: #{tpu_custom_call.1} parent=0
    _
  %s9 = ssub.s32 1, %s7
  %s10 = scalar_select 0, %s9, %s7
  $region1: #{tpu_custom_call.1} parent=0
    #allocation2 [shape = 'u8[4096]{0}', space=vmem, size = 0x1000, scoped, tag = 'input window, operand 0']
    #allocation3 [shape = 's32[2]{0}', space=sflag, size = 0x8, scoped, tag = 'scoped memory for tpu_custom_call.1']
    #allocation4 [shape = 's32[2]{0}', space=sflag, size = 0x8, scoped, tag = 'scoped memory for tpu_custom_call.1']
    #allocation5 [shape = 'u8[1024]{0}', space=vmem, size = 0x400, scoped, tag = 'input window, operand 1']
    #allocation6 [shape = 's32[2]{0}', space=sflag, size = 0x8, scoped, tag = 'scoped memory for tpu_custom_call.1']
    #allocation7 [shape = 'u8[8192]{0}', space=vmem, size = 0x2000, scoped, tag = 'input window, operand 2, single buffered']
    #allocation8 [shape = 'u8[8192]{0}', space=vmem, size = 0x2000, scoped, tag = 'input window, operand 4, single buffered']
    #allocation9 [shape = 's32[1]{0}', space=sflag, size = 0x4, scoped, tag = 'scoped memory for tpu_custom_call.1']
    #allocation10 [shape = 'u8[8192]{0}', space=vmem, size = 0x2000, scoped, tag = 'output window, operand 0']
    %11 = vsyncpa [#allocation3], 0
    %s12 = scalar_lea.sflag [#allocation3], 1
    %13 = vsyncpa %s12, 0
    %14 = vsyncpa [#allocation6], 0
    %s15 = scalar_lea.sflag [#allocation6], 1
    %16 = vsyncpa %s15, 0
    %17 = vsyncpa [#allocation9], 0
    %18 = vsyncpa [#allocation4], 0
    %s19 = scalar_lea.sflag [#allocation4], 1
    %20 = vsyncpa %s19, 0
    loop: start=0, step=1, limit=4
    $region2: #{tpu_custom_call.1} parent=1 // loop_pre_header
      _
    $region3: #{tpu_custom_call.1} parent=1 // loop_header
      %s22 = sphi 0, %s26
      %p23 = scmp.ge.s32.totalorder %s22, 4
      %s32 = sphi 0, %s34
      %s35 = sphi 0, %s32
      %s36 = sphi 0, %s35
      %s52 = sphi 0, %s36
      %s58 = sphi 0, %s60
      %s61 = sphi 0, %s58
      %s62 = sphi 0, %s61
      %s78 = sphi 0, %s62
      %s82 = sphi 0, %s82
      %s84 = sphi 0, %s82
      %s85 = sphi 0, %s84
      %s99 = sphi 0, %s85
      %s103 = sphi 0, %s103
      %s105 = sphi 0, %s103
      %s106 = sphi 0, %s105
      %s120 = sphi 0, %s106
      %s124 = sphi 0, %s124
      %s126 = sphi 0, %s124
      %s127 = sphi 0, %s126
      %s141 = sphi 0, %s127
      %s145 = sphi 0, %s145
      %s147 = sphi 0, %s145
      %s148 = sphi 0, %s147
      %s162 = sphi 0, %s148
      %s168 = sphi 0, %s170
      %s171 = sphi 0, %s168
      %s172 = sphi 0, %s171
      %s188 = sphi 0, %s172
    $region4: #{tpu_custom_call.1} parent=1 // loop_header_branch
      %25 = sbr.rel (%p23) target = $region8
    $region5: #{tpu_custom_call.1} parent=1 // loop_body
      %s27 = ssub.s32 %s22, 1
      %s28 = ssub.s32 %s22, 2
      %s29 = sadd.s32 %s22, 1
      %s30 = ssub.s32 %s22, %s29
      %p31 = scmp.eq.s32.totalorder %s30, 0
      %s33 = sadd.s32 %s32, 1
      %s34 = scalar_select %p31, %s32, %s33
      %p37 = pneg %p31
      %p38 = scmp.eq.s32.totalorder %s22, 1
      %p39 = por %p37, %p38
      %p40 = scmp.ne.s32.totalorder %s32, %s35
      %p41 = scmp.eq.s32.totalorder %s22, 0
      %p42 = por %p40, %p41
      %p43 = scmp.ne.s32.totalorder %s32, %s35
      %p44 = scmp.eq.s32.totalorder %s27, 1
      %p45 = por %p43, %p44
      %p46 = scmp.ne.s32.totalorder %s35, %s36
      %p47 = scmp.eq.s32.totalorder %s27, 0
      %p48 = por %p46, %p47
      %p49 = scmp.ne.s32.totalorder %s35, %s36
      %p50 = scmp.eq.s32.totalorder %s28, 1
      %p51 = por %p49, %p50
      %p53 = scmp.ne.s32.totalorder %s36, %s52
      %p54 = scmp.eq.s32.totalorder %s28, 0
      %p55 = por %p53, %p54
      %s56 = ssub.s32 %s22, %s29
      %p57 = scmp.eq.s32.totalorder %s56, 0
      %s59 = sadd.s32 %s58, 1
      %s60 = scalar_select %p57, %s58, %s59
      %p63 = pneg %p57
      %p64 = scmp.eq.s32.totalorder %s22, 1
      %p65 = por %p63, %p64
      %p66 = scmp.ne.s32.totalorder %s58, %s61
      %p67 = scmp.eq.s32.totalorder %s22, 0
      %p68 = por %p66, %p67
      %p69 = scmp.ne.s32.totalorder %s58, %s61
      %p70 = scmp.eq.s32.totalorder %s27, 1
      %p71 = por %p69, %p70
      %p72 = scmp.ne.s32.totalorder %s61, %s62
      %p73 = scmp.eq.s32.totalorder %s27, 0
      %p74 = por %p72, %p73
      %p75 = scmp.ne.s32.totalorder %s61, %s62
      %p76 = scmp.eq.s32.totalorder %s28, 1
      %p77 = por %p75, %p76
      %p79 = scmp.ne.s32.totalorder %s62, %s78
      %p80 = scmp.eq.s32.totalorder %s28, 0
      %p81 = por %p79, %p80
      %s83 = sadd.s32 %s82, 1
      %p86 = scmp.eq.s32.totalorder %s22, 1
      %p87 = scmp.ne.s32.totalorder %s82, %s84
      %p88 = scmp.eq.s32.totalorder %s22, 0
      %p89 = por %p87, %p88
      %p90 = scmp.ne.s32.totalorder %s82, %s84
      %p91 = scmp.eq.s32.totalorder %s27, 1
      %p92 = por %p90, %p91
      %p93 = scmp.ne.s32.totalorder %s84, %s85
      %p94 = scmp.eq.s32.totalorder %s27, 0
      %p95 = por %p93, %p94
      %p96 = scmp.ne.s32.totalorder %s84, %s85
      %p97 = scmp.eq.s32.totalorder %s28, 1
      %p98 = por %p96, %p97
      %p100 = scmp.ne.s32.totalorder %s85, %s99
      %p101 = scmp.eq.s32.totalorder %s28, 0
      %p102 = por %p100, %p101
      %s104 = sadd.s32 %s103, 1
      %p107 = scmp.eq.s32.totalorder %s22, 1
      %p108 = scmp.ne.s32.totalorder %s103, %s105
      %p109 = scmp.eq.s32.totalorder %s22, 0
      %p110 = por %p108, %p109
      %p111 = scmp.ne.s32.totalorder %s103, %s105
      %p112 = scmp.eq.s32.totalorder %s27, 1
      %p113 = por %p111, %p112
      %p114 = scmp.ne.s32.totalorder %s105, %s106
      %p115 = scmp.eq.s32.totalorder %s27, 0
      %p116 = por %p114, %p115
      %p117 = scmp.ne.s32.totalorder %s105, %s106
      %p118 = scmp.eq.s32.totalorder %s28, 1
      %p119 = por %p117, %p118
      %p121 = scmp.ne.s32.totalorder %s106, %s120
      %p122 = scmp.eq.s32.totalorder %s28, 0
      %p123 = por %p121, %p122
      %s125 = sadd.s32 %s124, 1
      %p128 = scmp.eq.s32.totalorder %s22, 1
      %p129 = scmp.ne.s32.totalorder %s124, %s126
      %p130 = scmp.eq.s32.totalorder %s22, 0
      %p131 = por %p129, %p130
      %p132 = scmp.ne.s32.totalorder %s124, %s126
      %p133 = scmp.eq.s32.totalorder %s27, 1
      %p134 = por %p132, %p133
      %p135 = scmp.ne.s32.totalorder %s126, %s127
      %p136 = scmp.eq.s32.totalorder %s27, 0
      %p137 = por %p135, %p136
      %p138 = scmp.ne.s32.totalorder %s126, %s127
      %p139 = scmp.eq.s32.totalorder %s28, 1
      %p140 = por %p138, %p139
      %p142 = scmp.ne.s32.totalorder %s127, %s141
      %p143 = scmp.eq.s32.totalorder %s28, 0
      %p144 = por %p142, %p143
      %s146 = sadd.s32 %s145, 1
      %p149 = scmp.eq.s32.totalorder %s22, 1
      %p150 = scmp.ne.s32.totalorder %s145, %s147
      %p151 = scmp.eq.s32.totalorder %s22, 0
      %p152 = por %p150, %p151
      %p153 = scmp.ne.s32.totalorder %s145, %s147
      %p154 = scmp.eq.s32.totalorder %s27, 1
      %p155 = por %p153, %p154
      %p156 = scmp.ne.s32.totalorder %s147, %s148
      %p157 = scmp.eq.s32.totalorder %s27, 0
      %p158 = por %p156, %p157
      %p159 = scmp.ne.s32.totalorder %s147, %s148
      %p160 = scmp.eq.s32.totalorder %s28, 1
      %p161 = por %p159, %p160
      %p163 = scmp.ne.s32.totalorder %s148, %s162
      %p164 = scmp.eq.s32.totalorder %s28, 0
      %p165 = por %p163, %p164
      %s166 = ssub.s32 %s22, %s29
      %p167 = scmp.eq.s32.totalorder %s166, 0
      %s169 = sadd.s32 %s168, 1
      %s170 = scalar_select %p167, %s168, %s169
      %p173 = pneg %p167
      %p174 = scmp.eq.s32.totalorder %s22, 1
      %p175 = por %p173, %p174
      %p176 = scmp.ne.s32.totalorder %s168, %s171
      %p177 = scmp.eq.s32.totalorder %s22, 0
      %p178 = por %p176, %p177
      %p179 = scmp.ne.s32.totalorder %s168, %s171
      %p180 = scmp.eq.s32.totalorder %s27, 1
      %p181 = por %p179, %p180
      %p182 = scmp.ne.s32.totalorder %s171, %s172
      %p183 = scmp.eq.s32.totalorder %s27, 0
      %p184 = por %p182, %p183
      %p185 = scmp.ne.s32.totalorder %s171, %s172
      %p186 = scmp.eq.s32.totalorder %s28, 1
      %p187 = por %p185, %p186
      %p189 = scmp.ne.s32.totalorder %s172, %s188
      %p190 = scmp.eq.s32.totalorder %s28, 0
      %p191 = por %p189, %p190
      %p192 = scmp.le.s32.totalorder 1, %s22
      %p193 = scmp.lt.s32.totalorder %s22, 3
      %p194 = pnand %p192, %p193
      %p195 = pneg %p194
      // Predicated region
      $region9: #{tpu_custom_call.1} parent=5 // pred_check
        _
      $region10: #{tpu_custom_call.1} parent=5 // pred_check_branch
        %197 = sbr.rel (%p194) target = $region12
      $region11: #{tpu_custom_call.1} parent=5 // pred_region
        %s198 = ssub.s32 %s22, 1
        // Predicated region
        $region13: #{tpu_custom_call.1} parent=11 // pred_check
          %p199 = pneg %p95
        $region14: #{tpu_custom_call.1} parent=11 // pred_check_branch
          %201 = sbr.rel (%p199) target = $region16
        $region15: #{tpu_custom_call.1} parent=11 // pred_region
          %s203 = ssub.s32 256, 256
          %204 = vsyncadd [#allocation6], %s203
          %s205 = sshll.u32 [#allocation7], 4
          %s206 = int_to_ptr.vmem [resolvable:$true] %s205
          %211 = dma.hbm_to_vmem [thread:$0]  %s2, 256, %s206, [#allocation6], 64, 64, 4
        $region16: #{tpu_custom_call.1} parent=11 // pred_fallthru
          _
        // Predicated region
        $region17: #{tpu_custom_call.1} parent=11 // pred_check
          %p212 = pneg %p116
        $region18: #{tpu_custom_call.1} parent=11 // pred_check_branch
          %214 = sbr.rel (%p212) target = $region20
        $region19: #{tpu_custom_call.1} parent=11 // pred_region
          _
        $region20: #{tpu_custom_call.1} parent=11 // pred_fallthru
          _
        // Predicated region
        $region21: #{tpu_custom_call.1} parent=11 // pred_check
          %p215 = pneg %p137
        $region22: #{tpu_custom_call.1} parent=11 // pred_check_branch
          %217 = sbr.rel (%p215) target = $region24
        $region23: #{tpu_custom_call.1} parent=11 // pred_region
          %s219 = ssub.s32 256, 256
          %220 = vsyncadd [#allocation9], %s219
          %s221 = sshll.u32 [#allocation8], 4
          %s222 = int_to_ptr.vmem [resolvable:$true] %s221
          %227 = dma.hbm_to_vmem [thread:$0]  %s4, 256, %s222, [#allocation9], 64, 64, 4
        $region24: #{tpu_custom_call.1} parent=11 // pred_fallthru
          _
        // Predicated region
        $region25: #{tpu_custom_call.1} parent=11 // pred_check
          %p228 = pneg %p158
        $region26: #{tpu_custom_call.1} parent=11 // pred_check_branch
          %230 = sbr.rel (%p228) target = $region28
        $region27: #{tpu_custom_call.1} parent=11 // pred_region
          _
        $region28: #{tpu_custom_call.1} parent=11 // pred_fallthru
          _
      $region12: #{tpu_custom_call.1} parent=5 // pred_fallthru
        _
      %p231 = scmp.lt.s32.totalorder %s22, 2
      // Predicated region
      $region29: #{tpu_custom_call.1} parent=5 // pred_check
        %p232 = pneg %p231
      $region30: #{tpu_custom_call.1} parent=5 // pred_check_branch
        %234 = sbr.rel (%p232) target = $region32
      $region31: #{tpu_custom_call.1} parent=5 // pred_region
        // Predicated region
        $region33: #{tpu_custom_call.1} parent=31 // pred_check
          %p235 = pneg %p42
        $region34: #{tpu_custom_call.1} parent=31 // pred_check_branch
          %237 = sbr.rel (%p235) target = $region36
        $region35: #{tpu_custom_call.1} parent=31 // pred_region
          %s238 = sand.u32 %s32, 1
          %s239 = scalar_lea.sflag [#allocation3], %s238
          %s240 = sand.u32 %s32, 1
          %s241 = smul.addr %s240, 4
          %s242 = scalar_lea.vmem [#allocation2], %s241
          %s244 = ssub.s32 64, 64
          %245 = vsyncadd %s239, %s244
          %s246 = smul.addr %s22, 64
          %s247 = scalar_lea.hbm %s0, %s246
          %s249 = sshll.u32 %s242, 4
          %s250 = int_to_ptr.vmem [resolvable:$true] %s249
          %252 = dma.hbm_to_vmem [thread:$0]  %s247, 64, %s250, %s239
        $region36: #{tpu_custom_call.1} parent=31 // pred_fallthru
          _
        // Predicated region
        $region37: #{tpu_custom_call.1} parent=31 // pred_check
          %p253 = pneg %p68
        $region38: #{tpu_custom_call.1} parent=31 // pred_check_branch
          %255 = sbr.rel (%p253) target = $region40
        $region39: #{tpu_custom_call.1} parent=31 // pred_region
          %s256 = sand.u32 %s22, 1
          %s257 = scalar_lea.sflag [#allocation6], %s256
          %s258 = sand.u32 %s58, 1
          %s259 = scalar_lea.vmem [#allocation5], %s258
          %s261 = ssub.s32 16, 16
          %262 = vsyncadd %s257, %s261
          %s263 = smul.addr %s22, 16
          %s264 = scalar_lea.hbm %s1, %s263
          %s266 = sshll.u32 %s259, 4
          %s267 = int_to_ptr.vmem [resolvable:$true] %s266
          %269 = dma.hbm_to_vmem [thread:$0]  %s264, 16, %s267, %s257
        $region40: #{tpu_custom_call.1} parent=31 // pred_fallthru
          _
      $region32: #{tpu_custom_call.1} parent=5 // pred_fallthru
        _
      %p270 = scmp.le.s32.totalorder 1, %s22
      %p271 = scmp.lt.s32.totalorder %s22, 3
      %p272 = pnand %p270, %p271
      %p273 = pneg %p272
      // Predicated region
      $region41: #{tpu_custom_call.1} parent=5 // pred_check
        _
      $region42: #{tpu_custom_call.1} parent=5 // pred_check_branch
        %275 = sbr.rel (%p272) target = $region44
      $region43: #{tpu_custom_call.1} parent=5 // pred_region
        %s276 = ssub.s32 %s22, 1
        %s277 = sand.u32 %s35, 1
        %s278 = scalar_lea.sflag [#allocation3], %s277
        %s279 = sand.u32 %s35, 1
        %s280 = smul.addr %s279, 4
        %s281 = scalar_lea.vmem [#allocation2], %s280
        // Predicated region
        $region45: #{tpu_custom_call.1} parent=43 // pred_check
          %p282 = pneg %p48
        $region46: #{tpu_custom_call.1} parent=43 // pred_check_branch
          %284 = sbr.rel (%p282) target = $region48
        $region47: #{tpu_custom_call.1} parent=43 // pred_region
          %285 = dma.done %s278, 64
        $region48: #{tpu_custom_call.1} parent=43 // pred_fallthru
          _
        %s286 = sand.u32 %s27, 1
        %s287 = scalar_lea.sflag [#allocation6], %s286
        %s288 = sand.u32 %s61, 1
        %s289 = scalar_lea.vmem [#allocation5], %s288
        // Predicated region
        $region49: #{tpu_custom_call.1} parent=43 // pred_check
          %p290 = pneg %p74
        $region50: #{tpu_custom_call.1} parent=43 // pred_check_branch
          %292 = sbr.rel (%p290) target = $region52
        $region51: #{tpu_custom_call.1} parent=43 // pred_region
          %293 = dma.done %s287, 16
        $region52: #{tpu_custom_call.1} parent=43 // pred_fallthru
          _
        // Predicated region
        $region53: #{tpu_custom_call.1} parent=43 // pred_check
          %p294 = pneg %p95
        $region54: #{tpu_custom_call.1} parent=43 // pred_check_branch
          %296 = sbr.rel (%p294) target = $region56
        $region55: #{tpu_custom_call.1} parent=43 // pred_region
          %297 = dma.done [#allocation6], 256
        $region56: #{tpu_custom_call.1} parent=43 // pred_fallthru
          _
        // Predicated region
        $region57: #{tpu_custom_call.1} parent=43 // pred_check
          %p298 = pneg %p137
        $region58: #{tpu_custom_call.1} parent=43 // pred_check_branch
          %300 = sbr.rel (%p298) target = $region60
        $region59: #{tpu_custom_call.1} parent=43 // pred_region
          %301 = dma.done [#allocation9], 256
        $region60: #{tpu_custom_call.1} parent=43 // pred_fallthru
          _
        %s302 = sand.u32 %s35, 1
        %s303 = scalar_lea.sflag [#allocation3], %s302
        %s304 = sand.u32 %s35, 1
        %s305 = smul.addr %s304, 4
        %s306 = scalar_lea.vmem [#allocation2], %s305
        %p307 = pneg %p48
        %p308 = pneg %p45
        %s309 = sand.u32 %s27, 1
        %s310 = scalar_lea.sflag [#allocation6], %s309
        %s311 = sand.u32 %s61, 1
        %s312 = scalar_lea.vmem [#allocation5], %s311
        %p313 = pneg %p74
        %p314 = pneg %p71
        %p315 = pneg %p95
        %p316 = pneg %p92
        %p317 = pneg %p116
        %p318 = pneg %p113
        %p319 = pneg %p137
        %p320 = pneg %p134
        %p321 = pneg %p158
        %p322 = pneg %p155
        %p323 = pneg %p184
        %p324 = pneg %p181
        %s325 = sand.u32 %s171, 1
        %s326 = scalar_lea.sflag [#allocation4], %s325
        %s327 = sand.u32 %s171, 1
        %s328 = smul.addr %s327, 8
        %s329 = scalar_lea.vmem [#allocation10], %s328
        %v331 = vld [vmem:[%s281] sm:$0xf]
        %v332 = vld [vmem:[%s289] sm:$0x1]
        %v333 = vld [vmem:[#allocation7] sm:$0xf]
        %v334 = vld [vmem:[#allocation7 + $0x4] sm:$0xf]
        %v335 = vld [vmem:[#allocation7 + $0x8] sm:$0xf]
        %v336 = vld [vmem:[#allocation7 + $0xc] sm:$0xf]
        %v337 = vld [vmem:[%s3] sm:$0x1]
        %v339 = vlaneseq
        %v340 = vshrl.u32 %v339, 7
        %v341 = vsub.s32 0, %v340
        %v342 = vrot.slane %v337, %v341
        %v348 = vunpack.c.l.b16 %v333
        %v349 = vunpack.c.l.b16 %v334
        %v350 = vunpack.c.l.b16 %v335
        %v351 = vunpack.c.l.b16 %v336
        %v352 = vpack.c.b16 %v349, %v348
        %v353 = vpack.c.b16 %v351, %v350
        %vm356 = vcmask 261120
        %v358 = vsel %vm356, %v331, 0
        %360 = vmatprep.subr.bf16.mxu0 0
        %361 = vmatpush1.bf16.msra.mxu0 0
        %362 = vmatprep.subr.bf16.mxu0 0
        %363 = vmatpush1.bf16.msra.mxu0 0
        %364 = vmatprep.subr.bf16.mxu0 0
        %365 = vmatpush1.bf16.msra.mxu0 0
        %366 = vmatprep.subr.bf16.mxu0 0
        %367 = vmatpush1.bf16.msra.mxu0 0
        %368 = vmatprep.subr.bf16.mxu0 0
        %369 = vmatpush1.bf16.msra.mxu0 0
        %370 = vmatprep.subr.bf16.mxu0 0
        %371 = vmatpush1.bf16.msra.mxu0 0
        %372 = vmatprep.subr.bf16.mxu0 0
        %373 = vmatpush1.bf16.msra.mxu0 %v353
        %374 = vmatprep.subr.bf16.mxu0 0
        %375 = vmatpush1.bf16.msra.mxu0 %v352
        %376 = vmatprep.subr.bf16.mxu0 0
        %377 = vmatpush2.bf16.msra.mxu0 0
        %378 = vmatprep.subr.bf16.mxu0 0
        %379 = vmatpush2.bf16.msra.mxu0 0
        %380 = vmatprep.subr.bf16.mxu0 0
        %381 = vmatpush2.bf16.msra.mxu0 0
        %382 = vmatprep.subr.bf16.mxu0 0
        %383 = vmatpush2.bf16.msra.mxu0 0
        %384 = vmatprep.subr.bf16.mxu0 0
        %385 = vmatpush2.bf16.msra.mxu0 0
        %386 = vmatprep.subr.bf16.mxu0 0
        %387 = vmatpush2.bf16.msra.mxu0 0
        %388 = vmatprep.subr.bf16.mxu0 0
        %389 = vmatpush2.bf16.msra.mxu0 0
        %390 = vmatprep.subr.bf16.mxu0 0
        %391 = vmatpush2.bf16.msra.mxu0 0
        %392 = vmatprep.mubr.bf16.mxu0 0
        %393 = vmatmul.mubr.bf16.gmra.mxu0 %v358
        %v394 = vpop.f32.mrf.mxu0
        %v395 = vadd.f32 %v342, %v394
        %v396 = vpop.f32.mrf.mxu0
        %v397 = vpop.f32.mrf.mxu0
        %v398 = vpop.f32.mrf.mxu0
        %399 = vdwg.mxu0
        %v400 = vld [vmem:[#allocation8] sm:$0xf]
        %v401 = vld [vmem:[#allocation8 + $0x4] sm:$0xf]
        %v402 = vld [vmem:[#allocation8 + $0x8] sm:$0xf]
        %v403 = vld [vmem:[#allocation8 + $0xc] sm:$0xf]
        %v404 = vld [vmem:[%s5] sm:$0x1]
        %vm405 = vcmp.eq.f32.partialorder %v332, 0.0
        %v406 = vsel %vm405, -1e+09, 0.0
        %v407 = vmul.f32 %v395, 0.35355338
        %409 = vrot.lane.b32.xlu0 %v407, 120
        %v410 = vpop.permute.xlu0 %409
        %412 = vrot.lane.b32.xlu0 %v407, 112
        %v413 = vpop.permute.xlu0 %412
        %415 = vrot.lane.b32.xlu0 %v407, 104
        %v416 = vpop.permute.xlu0 %415
        %v418 = vcombine.low %v407, %v413
        %v419 = vcombine.high %v407, %v413
        %v421 = vunpack.c.l.s4 1983009808
        %v422 = vunpack.c.0.s8 %v421
        %v423 = vlaneseq
        %v424 = vshrl.u32 %v423, 7
        %v425 = vsub.s32 %v422, %v424
        %v426 = vrot.slane %v418, %v425
        %v428 = vunpack.c.l.s4 1983009808
        %v429 = vunpack.c.0.s8 %v428
        %v430 = vlaneseq
        %v431 = vshrl.u32 %v430, 7
        %v432 = vsub.s32 %v429, %v431
        %v433 = vrot.slane %v419, %v432
        %v434 = vcombine.low %v410, %v416
        %v435 = vcombine.high %v410, %v416
        %v437 = vunpack.c.l.s4 1983009808
        %v438 = vunpack.c.0.s8 %v437
        %v439 = vlaneseq
        %v440 = vshrl.u32 %v439, 7
        %v441 = vsub.s32 %v438, %v440
        %v442 = vrot.slane %v434, %v441
        %v444 = vunpack.c.l.s4 1983009808
        %v445 = vunpack.c.0.s8 %v444
        %v446 = vlaneseq
        %v447 = vshrl.u32 %v446, 7
        %v448 = vsub.s32 %v445, %v447
        %v449 = vrot.slane %v435, %v448
        %v450 = vcombine.low %v426, %v442
        %v451 = vcombine.high %v426, %v442
        %v453 = vunpack.c.l.s4 1934713408
        %v454 = vunpack.c.0.s8 %v453
        %v455 = vlaneseq
        %v456 = vshrl.u32 %v455, 7
        %v457 = vsub.s32 %v454, %v456
        %v458 = vrot.slane %v450, %v457
        %v460 = vunpack.c.l.s4 1934713408
        %v461 = vunpack.c.0.s8 %v460
        %v462 = vlaneseq
        %v463 = vshrl.u32 %v462, 7
        %v464 = vsub.s32 %v461, %v463
        %v465 = vrot.slane %v451, %v464
        %v466 = vcombine.low %v433, %v449
        %v467 = vcombine.high %v433, %v449
        %v469 = vunpack.c.l.s4 1934713408
        %v470 = vunpack.c.0.s8 %v469
        %v471 = vlaneseq
        %v472 = vshrl.u32 %v471, 7
        %v473 = vsub.s32 %v470, %v472
        %v474 = vrot.slane %v466, %v473
        %v476 = vunpack.c.l.s4 1934713408
        %v477 = vunpack.c.0.s8 %v476
        %v478 = vlaneseq
        %v479 = vshrl.u32 %v478, 7
        %v480 = vsub.s32 %v477, %v479
        %v481 = vrot.slane %v467, %v480
        %v482 = vcombine.high %v458, 0.0
        %v483 = vcombine.high %v465, 0.0
        %v484 = vcombine.high %v474, 0.0
        %v485 = vcombine.high %v481, 0.0
        %v486 = vcombine.low %v458, %v465
        %v488 = vunpack.c.l.s4 1983009808
        %v489 = vunpack.c.0.s8 %v488
        %v490 = vlaneseq
        %v491 = vshrl.u32 %v490, 7
        %v492 = vsub.s32 %v489, %v491
        %v493 = vrot.slane %v486, %v492
        %v494 = vcombine.low %v482, %v483
        %v496 = vunpack.c.l.s4 1983009808
        %v497 = vunpack.c.0.s8 %v496
        %v498 = vlaneseq
        %v499 = vshrl.u32 %v498, 7
        %v500 = vsub.s32 %v497, %v499
        %v501 = vrot.slane %v494, %v500
        %v502 = vcombine.low %v474, %v481
        %v504 = vunpack.c.l.s4 1983009808
        %v505 = vunpack.c.0.s8 %v504
        %v506 = vlaneseq
        %v507 = vshrl.u32 %v506, 7
        %v508 = vsub.s32 %v505, %v507
        %v509 = vrot.slane %v502, %v508
        %v510 = vcombine.low %v484, %v485
        %v512 = vunpack.c.l.s4 1983009808
        %v513 = vunpack.c.0.s8 %v512
        %v514 = vlaneseq
        %v515 = vshrl.u32 %v514, 7
        %v516 = vsub.s32 %v513, %v515
        %v517 = vrot.slane %v510, %v516
        %v518 = vcombine.low %v493, %v501
        %v519 = vcombine.high %v493, %v501
        %v521 = vunpack.c.l.s4 1934713408
        %v522 = vunpack.c.0.s8 %v521
        %v523 = vlaneseq
        %v524 = vshrl.u32 %v523, 7
        %v525 = vsub.s32 %v522, %v524
        %v526 = vrot.slane %v518, %v525
        %v528 = vunpack.c.l.s4 1934713408
        %v529 = vunpack.c.0.s8 %v528
        %v530 = vlaneseq
        %v531 = vshrl.u32 %v530, 7
        %v532 = vsub.s32 %v529, %v531
        %v533 = vrot.slane %v519, %v532
        %v534 = vcombine.low %v509, %v517
        %v535 = vcombine.high %v509, %v517
        %v537 = vunpack.c.l.s4 1934713408
        %v538 = vunpack.c.0.s8 %v537
        %v539 = vlaneseq
        %v540 = vshrl.u32 %v539, 7
        %v541 = vsub.s32 %v538, %v540
        %v542 = vrot.slane %v534, %v541
        %v544 = vunpack.c.l.s4 1934713408
        %v545 = vunpack.c.0.s8 %v544
        %v546 = vlaneseq
        %v547 = vshrl.u32 %v546, 7
        %v548 = vsub.s32 %v545, %v547
        %v549 = vrot.slane %v535, %v548
        %v550 = vcombine.low %v526, %v542
        %v551 = vcombine.high %v526, %v542
        %v552 = vcombine.low %v533, %v549
        %v553 = vcombine.high %v533, %v549
        %v554 = vpack.c.bf16 %v550, %v550
        %v555 = vpack.c.bf16 %v551, %v551
        %v556 = vpack.c.bf16 %v552, %v552
        %v557 = vpack.c.bf16 %v553, %v553
        %559 = vrot.lane.b32.xlu0 %v395, 120
        %v560 = vpop.permute.xlu0 %559
        %561 = vrot.lane.b32.xlu0 %v395, 112
        %v562 = vpop.permute.xlu0 %561
        %563 = vrot.lane.b32.xlu0 %v395, 104
        %v564 = vpop.permute.xlu0 %563
        %565 = vrot.lane.b32.xlu0 %v395, 96
        %v566 = vpop.permute.xlu0 %565
        %567 = vrot.lane.b32.xlu0 %v560, 96
        %v568 = vpop.permute.xlu0 %567
        %569 = vrot.lane.b32.xlu0 %v562, 96
        %v570 = vpop.permute.xlu0 %569
        %571 = vrot.lane.b32.xlu0 %v564, 96
        %v572 = vpop.permute.xlu0 %571
        %v577 = vcombine.low %v566, %v570
        %v578 = vcombine.high %v566, %v570
        %v580 = vunpack.c.l.s4 1983009808
        %v581 = vunpack.c.0.s8 %v580
        %v582 = vlaneseq
        %v583 = vshrl.u32 %v582, 7
        %v584 = vsub.s32 %v581, %v583
        %v585 = vrot.slane %v577, %v584
        %v587 = vunpack.c.l.s4 1983009808
        %v588 = vunpack.c.0.s8 %v587
        %v589 = vlaneseq
        %v590 = vshrl.u32 %v589, 7
        %v591 = vsub.s32 %v588, %v590
        %v592 = vrot.slane %v578, %v591
        %v593 = vcombine.low %v568, %v572
        %v594 = vcombine.high %v568, %v572
        %v596 = vunpack.c.l.s4 1983009808
        %v597 = vunpack.c.0.s8 %v596
        %v598 = vlaneseq
        %v599 = vshrl.u32 %v598, 7
        %v600 = vsub.s32 %v597, %v599
        %v601 = vrot.slane %v593, %v600
        %v603 = vunpack.c.l.s4 1983009808
        %v604 = vunpack.c.0.s8 %v603
        %v605 = vlaneseq
        %v606 = vshrl.u32 %v605, 7
        %v607 = vsub.s32 %v604, %v606
        %v608 = vrot.slane %v594, %v607
        %v609 = vcombine.low %v585, %v601
        %v610 = vcombine.high %v585, %v601
        %v612 = vunpack.c.l.s4 1934713408
        %v613 = vunpack.c.0.s8 %v612
        %v614 = vlaneseq
        %v615 = vshrl.u32 %v614, 7
        %v616 = vsub.s32 %v613, %v615
        %v617 = vrot.slane %v609, %v616
        %v619 = vunpack.c.l.s4 1934713408
        %v620 = vunpack.c.0.s8 %v619
        %v621 = vlaneseq
        %v622 = vshrl.u32 %v621, 7
        %v623 = vsub.s32 %v620, %v622
        %v624 = vrot.slane %v610, %v623
        %v625 = vcombine.low %v592, %v608
        %v626 = vcombine.high %v592, %v608
        %v628 = vunpack.c.l.s4 1934713408
        %v629 = vunpack.c.0.s8 %v628
        %v630 = vlaneseq
        %v631 = vshrl.u32 %v630, 7
        %v632 = vsub.s32 %v629, %v631
        %v633 = vrot.slane %v625, %v632
        %v635 = vunpack.c.l.s4 1934713408
        %v636 = vunpack.c.0.s8 %v635
        %v637 = vlaneseq
        %v638 = vshrl.u32 %v637, 7
        %v639 = vsub.s32 %v636, %v638
        %v640 = vrot.slane %v626, %v639
        %v641 = vcombine.high %v617, 0.0
        %v642 = vcombine.high %v624, 0.0
        %v643 = vcombine.high %v633, 0.0
        %v644 = vcombine.high %v640, 0.0
        %v645 = vcombine.low %v617, %v624
        %v647 = vunpack.c.l.s4 1983009808
        %v648 = vunpack.c.0.s8 %v647
        %v649 = vlaneseq
        %v650 = vshrl.u32 %v649, 7
        %v651 = vsub.s32 %v648, %v650
        %v652 = vrot.slane %v645, %v651
        %v653 = vcombine.low %v641, %v642
        %v655 = vunpack.c.l.s4 1983009808
        %v656 = vunpack.c.0.s8 %v655
        %v657 = vlaneseq
        %v658 = vshrl.u32 %v657, 7
        %v659 = vsub.s32 %v656, %v658
        %v660 = vrot.slane %v653, %v659
        %v661 = vcombine.low %v633, %v640
        %v663 = vunpack.c.l.s4 1983009808
        %v664 = vunpack.c.0.s8 %v663
        %v665 = vlaneseq
        %v666 = vshrl.u32 %v665, 7
        %v667 = vsub.s32 %v664, %v666
        %v668 = vrot.slane %v661, %v667
        %v669 = vcombine.low %v643, %v644
        %v671 = vunpack.c.l.s4 1983009808
        %v672 = vunpack.c.0.s8 %v671
        %v673 = vlaneseq
        %v674 = vshrl.u32 %v673, 7
        %v675 = vsub.s32 %v672, %v674
        %v676 = vrot.slane %v669, %v675
        %v677 = vcombine.low %v652, %v660
        %v678 = vcombine.high %v652, %v660
        %v680 = vunpack.c.l.s4 1934713408
        %v681 = vunpack.c.0.s8 %v680
        %v682 = vlaneseq
        %v683 = vshrl.u32 %v682, 7
        %v684 = vsub.s32 %v681, %v683
        %v685 = vrot.slane %v677, %v684
        %v687 = vunpack.c.l.s4 1934713408
        %v688 = vunpack.c.0.s8 %v687
        %v689 = vlaneseq
        %v690 = vshrl.u32 %v689, 7
        %v691 = vsub.s32 %v688, %v690
        %v692 = vrot.slane %v678, %v691
        %v693 = vcombine.low %v668, %v676
        %v694 = vcombine.high %v668, %v676
        %v696 = vunpack.c.l.s4 1934713408
        %v697 = vunpack.c.0.s8 %v696
        %v698 = vlaneseq
        %v699 = vshrl.u32 %v698, 7
        %v700 = vsub.s32 %v697, %v699
        %v701 = vrot.slane %v693, %v700
        %v703 = vunpack.c.l.s4 1934713408
        %v704 = vunpack.c.0.s8 %v703
        %v705 = vlaneseq
        %v706 = vshrl.u32 %v705, 7
        %v707 = vsub.s32 %v704, %v706
        %v708 = vrot.slane %v694, %v707
        %v709 = vcombine.low %v685, %v701
        %v710 = vcombine.high %v685, %v701
        %v711 = vcombine.low %v692, %v708
        %v712 = vcombine.high %v692, %v708
        %v713 = vpack.c.bf16 %v709, %v709
        %v714 = vpack.c.bf16 %v710, %v710
        %v715 = vpack.c.bf16 %v711, %v711
        %v716 = vpack.c.bf16 %v712, %v712
        %717 = vrot.lane.b32.xlu0 %v395, 64
        %v718 = vpop.permute.xlu0 %717
        %719 = vrot.lane.b32.xlu0 %v560, 64
        %v720 = vpop.permute.xlu0 %719
        %721 = vrot.lane.b32.xlu0 %v562, 64
        %v722 = vpop.permute.xlu0 %721
        %723 = vrot.lane.b32.xlu0 %v564, 64
        %v724 = vpop.permute.xlu0 %723
        %v729 = vcombine.low %v718, %v722
        %v730 = vcombine.high %v718, %v722
        %v732 = vunpack.c.l.s4 1983009808
        %v733 = vunpack.c.0.s8 %v732
        %v734 = vlaneseq
        %v735 = vshrl.u32 %v734, 7
        %v736 = vsub.s32 %v733, %v735
        %v737 = vrot.slane %v729, %v736
        %v739 = vunpack.c.l.s4 1983009808
        %v740 = vunpack.c.0.s8 %v739
        %v741 = vlaneseq
        %v742 = vshrl.u32 %v741, 7
        %v743 = vsub.s32 %v740, %v742
        %v744 = vrot.slane %v730, %v743
        %v745 = vcombine.low %v720, %v724
        %v746 = vcombine.high %v720, %v724
        %v748 = vunpack.c.l.s4 1983009808
        %v749 = vunpack.c.0.s8 %v748
        %v750 = vlaneseq
        %v751 = vshrl.u32 %v750, 7
        %v752 = vsub.s32 %v749, %v751
        %v753 = vrot.slane %v745, %v752
        %v755 = vunpack.c.l.s4 1983009808
        %v756 = vunpack.c.0.s8 %v755
        %v757 = vlaneseq
        %v758 = vshrl.u32 %v757, 7
        %v759 = vsub.s32 %v756, %v758
        %v760 = vrot.slane %v746, %v759
        %v761 = vcombine.low %v737, %v753
        %v762 = vcombine.high %v737, %v753
        %v764 = vunpack.c.l.s4 1934713408
        %v765 = vunpack.c.0.s8 %v764
        %v766 = vlaneseq
        %v767 = vshrl.u32 %v766, 7
        %v768 = vsub.s32 %v765, %v767
        %v769 = vrot.slane %v761, %v768
        %v771 = vunpack.c.l.s4 1934713408
        %v772 = vunpack.c.0.s8 %v771
        %v773 = vlaneseq
        %v774 = vshrl.u32 %v773, 7
        %v775 = vsub.s32 %v772, %v774
        %v776 = vrot.slane %v762, %v775
        %v777 = vcombine.low %v744, %v760
        %v778 = vcombine.high %v744, %v760
        %v780 = vunpack.c.l.s4 1934713408
        %v781 = vunpack.c.0.s8 %v780
        %v782 = vlaneseq
        %v783 = vshrl.u32 %v782, 7
        %v784 = vsub.s32 %v781, %v783
        %v785 = vrot.slane %v777, %v784
        %v787 = vunpack.c.l.s4 1934713408
        %v788 = vunpack.c.0.s8 %v787
        %v789 = vlaneseq
        %v790 = vshrl.u32 %v789, 7
        %v791 = vsub.s32 %v788, %v790
        %v792 = vrot.slane %v778, %v791
        %v793 = vcombine.high %v769, 0.0
        %v794 = vcombine.high %v776, 0.0
        %v795 = vcombine.high %v785, 0.0
        %v796 = vcombine.high %v792, 0.0
        %v797 = vcombine.low %v769, %v776
        %v799 = vunpack.c.l.s4 1983009808
        %v800 = vunpack.c.0.s8 %v799
        %v801 = vlaneseq
        %v802 = vshrl.u32 %v801, 7
        %v803 = vsub.s32 %v800, %v802
        %v804 = vrot.slane %v797, %v803
        %v805 = vcombine.low %v793, %v794
        %v807 = vunpack.c.l.s4 1983009808
        %v808 = vunpack.c.0.s8 %v807
        %v809 = vlaneseq
        %v810 = vshrl.u32 %v809, 7
        %v811 = vsub.s32 %v808, %v810
        %v812 = vrot.slane %v805, %v811
        %v813 = vcombine.low %v785, %v792
        %v815 = vunpack.c.l.s4 1983009808
        %v816 = vunpack.c.0.s8 %v815
        %v817 = vlaneseq
        %v818 = vshrl.u32 %v817, 7
        %v819 = vsub.s32 %v816, %v818
        %v820 = vrot.slane %v813, %v819
        %v821 = vcombine.low %v795, %v796
        %v823 = vunpack.c.l.s4 1983009808
        %v824 = vunpack.c.0.s8 %v823
        %v825 = vlaneseq
        %v826 = vshrl.u32 %v825, 7
        %v827 = vsub.s32 %v824, %v826
        %v828 = vrot.slane %v821, %v827
        %v829 = vcombine.low %v804, %v812
        %v830 = vcombine.high %v804, %v812
        %v832 = vunpack.c.l.s4 1934713408
        %v833 = vunpack.c.0.s8 %v832
        %v834 = vlaneseq
        %v835 = vshrl.u32 %v834, 7
        %v836 = vsub.s32 %v833, %v835
        %v837 = vrot.slane %v829, %v836
        %v839 = vunpack.c.l.s4 1934713408
        %v840 = vunpack.c.0.s8 %v839
        %v841 = vlaneseq
        %v842 = vshrl.u32 %v841, 7
        %v843 = vsub.s32 %v840, %v842
        %v844 = vrot.slane %v830, %v843
        %v845 = vcombine.low %v820, %v828
        %v846 = vcombine.high %v820, %v828
        %v848 = vunpack.c.l.s4 1934713408
        %v849 = vunpack.c.0.s8 %v848
        %v850 = vlaneseq
        %v851 = vshrl.u32 %v850, 7
        %v852 = vsub.s32 %v849, %v851
        %v853 = vrot.slane %v845, %v852
        %v855 = vunpack.c.l.s4 1934713408
        %v856 = vunpack.c.0.s8 %v855
        %v857 = vlaneseq
        %v858 = vshrl.u32 %v857, 7
        %v859 = vsub.s32 %v856, %v858
        %v860 = vrot.slane %v846, %v859
        %v861 = vcombine.low %v837, %v853
        %v862 = vcombine.high %v837, %v853
        %v863 = vcombine.low %v844, %v860
        %v864 = vcombine.high %v844, %v860
        %v865 = vpack.c.bf16 %v861, %v861
        %v866 = vpack.c.bf16 %v862, %v862
        %v867 = vpack.c.bf16 %v863, %v863
        %v868 = vpack.c.bf16 %v864, %v864
        %v870 = vlaneseq
        %v871 = vshrl.u32 %v870, 7
        %v872 = vsub.s32 0, %v871
        %v873 = vrot.slane %v406, %v872
        %vm875 = vcmask 64512
        %v877 = vsel %vm875, %v554, 0
        %v880 = vsel %vm875, %v713, 0
        %882 = vmatprep.subr.bf16.mxu0 0
        %883 = vmatpush1.bf16.xpose.msra.mxu0 0
        %884 = vmatprep.subr.bf16.mxu0 0
        %885 = vmatpush1.bf16.xpose.msra.mxu0 0
        %886 = vmatprep.subr.bf16.mxu0 0
        %887 = vmatpush1.bf16.xpose.msra.mxu0 0
        %888 = vmatprep.subr.bf16.mxu0 0
        %889 = vmatpush1.bf16.xpose.msra.mxu0 0
        %890 = vmatprep.subr.bf16.mxu0 0
        %891 = vmatpush1.bf16.xpose.msra.mxu0 0
        %892 = vmatprep.subr.bf16.mxu0 0
        %893 = vmatpush1.bf16.xpose.msra.mxu0 0
        %894 = vmatprep.subr.bf16.mxu0 0
        %895 = vmatpush1.bf16.xpose.msra.mxu0 0
        %896 = vmatprep.subr.bf16.mxu0 0
        %897 = vmatpush1.bf16.xpose.msra.mxu0 %v880
        %898 = vmatprep.subr.bf16.mxu0 0
        %899 = vmatpush2.bf16.xpose.msra.mxu0 0
        %900 = vmatprep.subr.bf16.mxu0 0
        %901 = vmatpush2.bf16.xpose.msra.mxu0 0
        %902 = vmatprep.subr.bf16.mxu0 0
        %903 = vmatpush2.bf16.xpose.msra.mxu0 0
        %904 = vmatprep.subr.bf16.mxu0 0
        %905 = vmatpush2.bf16.xpose.msra.mxu0 0
        %906 = vmatprep.subr.bf16.mxu0 0
        %907 = vmatpush2.bf16.xpose.msra.mxu0 0
        %908 = vmatprep.subr.bf16.mxu0 0
        %909 = vmatpush2.bf16.xpose.msra.mxu0 0
        %910 = vmatprep.subr.bf16.mxu0 0
        %911 = vmatpush2.bf16.xpose.msra.mxu0 0
        %912 = vmatprep.subr.bf16.mxu0 0
        %913 = vmatpush2.bf16.xpose.msra.mxu0 0
        %914 = vmatprep.mubr.bf16.mxu0 0
        %915 = vmatmul.mubr.bf16.gmra.mxu0 %v877
        %v916 = vpop.f32.mrf.mxu0
        %v917 = vadd.f32 %v873, %v916
        %v918 = vpop.f32.mrf.mxu0
        %v919 = vpop.f32.mrf.mxu0
        %v920 = vpop.f32.mrf.mxu0
        %921 = vdwg.mxu0
        %v923 = vsel %vm875, %v555, 0
        %v926 = vsel %vm875, %v714, 0
        %928 = vmatprep.subr.bf16.mxu0 0
        %929 = vmatpush1.bf16.xpose.msra.mxu0 0
        %930 = vmatprep.subr.bf16.mxu0 0
        %931 = vmatpush1.bf16.xpose.msra.mxu0 0
        %932 = vmatprep.subr.bf16.mxu0 0
        %933 = vmatpush1.bf16.xpose.msra.mxu0 0
        %934 = vmatprep.subr.bf16.mxu0 0
        %935 = vmatpush1.bf16.xpose.msra.mxu0 0
        %936 = vmatprep.subr.bf16.mxu0 0
        %937 = vmatpush1.bf16.xpose.msra.mxu0 0
        %938 = vmatprep.subr.bf16.mxu0 0
        %939 = vmatpush1.bf16.xpose.msra.mxu0 0
        %940 = vmatprep.subr.bf16.mxu0 0
        %941 = vmatpush1.bf16.xpose.msra.mxu0 0
        %942 = vmatprep.subr.bf16.mxu0 0
        %943 = vmatpush1.bf16.xpose.msra.mxu0 %v926
        %944 = vmatprep.subr.bf16.mxu0 0
        %945 = vmatpush2.bf16.xpose.msra.mxu0 0
        %946 = vmatprep.subr.bf16.mxu0 0
        %947 = vmatpush2.bf16.xpose.msra.mxu0 0
        %948 = vmatprep.subr.bf16.mxu0 0
        %949 = vmatpush2.bf16.xpose.msra.mxu0 0
        %950 = vmatprep.subr.bf16.mxu0 0
        %951 = vmatpush2.bf16.xpose.msra.mxu0 0
        %952 = vmatprep.subr.bf16.mxu0 0
        %953 = vmatpush2.bf16.xpose.msra.mxu0 0
        %954 = vmatprep.subr.bf16.mxu0 0
        %955 = vmatpush2.bf16.xpose.msra.mxu0 0
        %956 = vmatprep.subr.bf16.mxu0 0
        %957 = vmatpush2.bf16.xpose.msra.mxu0 0
        %958 = vmatprep.subr.bf16.mxu0 0
        %959 = vmatpush2.bf16.xpose.msra.mxu0 0
        %960 = vmatprep.mubr.bf16.mxu0 0
        %961 = vmatmul.mubr.bf16.gmra.mxu0 %v923
        %v962 = vpop.f32.mrf.mxu0
        %v963 = vadd.f32 %v873, %v962
        %v964 = vpop.f32.mrf.mxu0
        %v965 = vpop.f32.mrf.mxu0
        %v966 = vpop.f32.mrf.mxu0
        %967 = vdwg.mxu0
        %v969 = vsel %vm875, %v556, 0
        %v972 = vsel %vm875, %v715, 0
        %974 = vmatprep.subr.bf16.mxu0 0
        %975 = vmatpush1.bf16.xpose.msra.mxu0 0
        %976 = vmatprep.subr.bf16.mxu0 0
        %977 = vmatpush1.bf16.xpose.msra.mxu0 0
        %978 = vmatprep.subr.bf16.mxu0 0
        %979 = vmatpush1.bf16.xpose.msra.mxu0 0
        %980 = vmatprep.subr.bf16.mxu0 0
        %981 = vmatpush1.bf16.xpose.msra.mxu0 0
        %982 = vmatprep.subr.bf16.mxu0 0
        %983 = vmatpush1.bf16.xpose.msra.mxu0 0
        %984 = vmatprep.subr.bf16.mxu0 0
        %985 = vmatpush1.bf16.xpose.msra.mxu0 0
        %986 = vmatprep.subr.bf16.mxu0 0
        %987 = vmatpush1.bf16.xpose.msra.mxu0 0
        %988 = vmatprep.subr.bf16.mxu0 0
        %989 = vmatpush1.bf16.xpose.msra.mxu0 %v972
        %990 = vmatprep.subr.bf16.mxu0 0
        %991 = vmatpush2.bf16.xpose.msra.mxu0 0
        %992 = vmatprep.subr.bf16.mxu0 0
        %993 = vmatpush2.bf16.xpose.msra.mxu0 0
        %994 = vmatprep.subr.bf16.mxu0 0
        %995 = vmatpush2.bf16.xpose.msra.mxu0 0
        %996 = vmatprep.subr.bf16.mxu0 0
        %997 = vmatpush2.bf16.xpose.msra.mxu0 0
        %998 = vmatprep.subr.bf16.mxu0 0
        %999 = vmatpush2.bf16.xpose.msra.mxu0 0
        %1000 = vmatprep.subr.bf16.mxu0 0
        %1001 = vmatpush2.bf16.xpose.msra.mxu0 0
        %1002 = vmatprep.subr.bf16.mxu0 0
        %1003 = vmatpush2.bf16.xpose.msra.mxu0 0
        %1004 = vmatprep.subr.bf16.mxu0 0
        %1005 = vmatpush2.bf16.xpose.msra.mxu0 0
        %1006 = vmatprep.mubr.bf16.mxu0 0
        %1007 = vmatmul.mubr.bf16.gmra.mxu0 %v969
        %v1008 = vpop.f32.mrf.mxu0
        %v1009 = vadd.f32 %v873, %v1008
        %v1010 = vpop.f32.mrf.mxu0
        %v1011 = vpop.f32.mrf.mxu0
        %v1012 = vpop.f32.mrf.mxu0
        %1013 = vdwg.mxu0
        %v1015 = vsel %vm875, %v557, 0
        %v1018 = vsel %vm875, %v716, 0
        %1020 = vmatprep.subr.bf16.mxu0 0
        %1021 = vmatpush1.bf16.xpose.msra.mxu0 0
        %1022 = vmatprep.subr.bf16.mxu0 0
        %1023 = vmatpush1.bf16.xpose.msra.mxu0 0
        %1024 = vmatprep.subr.bf16.mxu0 0
        %1025 = vmatpush1.bf16.xpose.msra.mxu0 0
        %1026 = vmatprep.subr.bf16.mxu0 0
        %1027 = vmatpush1.bf16.xpose.msra.mxu0 0
        %1028 = vmatprep.subr.bf16.mxu0 0
        %1029 = vmatpush1.bf16.xpose.msra.mxu0 0
        %1030 = vmatprep.subr.bf16.mxu0 0
        %1031 = vmatpush1.bf16.xpose.msra.mxu0 0
        %1032 = vmatprep.subr.bf16.mxu0 0
        %1033 = vmatpush1.bf16.xpose.msra.mxu0 0
        %1034 = vmatprep.subr.bf16.mxu0 0
        %1035 = vmatpush1.bf16.xpose.msra.mxu0 %v1018
        %1036 = vmatprep.subr.bf16.mxu0 0
        %1037 = vmatpush2.bf16.xpose.msra.mxu0 0
        %1038 = vmatprep.subr.bf16.mxu0 0
        %1039 = vmatpush2.bf16.xpose.msra.mxu0 0
        %1040 = vmatprep.subr.bf16.mxu0 0
        %1041 = vmatpush2.bf16.xpose.msra.mxu0 0
        %1042 = vmatprep.subr.bf16.mxu0 0
        %1043 = vmatpush2.bf16.xpose.msra.mxu0 0
        %1044 = vmatprep.subr.bf16.mxu0 0
        %1045 = vmatpush2.bf16.xpose.msra.mxu0 0
        %1046 = vmatprep.subr.bf16.mxu0 0
        %1047 = vmatpush2.bf16.xpose.msra.mxu0 0
        %1048 = vmatprep.subr.bf16.mxu0 0
        %1049 = vmatpush2.bf16.xpose.msra.mxu0 0
        %1050 = vmatprep.subr.bf16.mxu0 0
        %1051 = vmatpush2.bf16.xpose.msra.mxu0 0
        %1052 = vmatprep.mubr.bf16.mxu0 0
        %1053 = vmatmul.mubr.bf16.gmra.mxu0 %v1015
        %v1054 = vpop.f32.mrf.mxu0
        %v1055 = vadd.f32 %v873, %v1054
        %v1056 = vpop.f32.mrf.mxu0
        %v1057 = vpop.f32.mrf.mxu0
        %v1058 = vpop.f32.mrf.mxu0
        %1059 = vdwg.mxu0
        %v1060 = vsel %vm875, %v917, -inf
        %1061 = vmax.xlane.f32.xlu0 %v1060
        %v1062 = vpop.xlane.xlu0 %1061
        %v1063 = vsel %vm875, %v963, -inf
        %1064 = vmax.xlane.f32.xlu0 %v1063
        %v1065 = vpop.xlane.xlu0 %1064
        %v1066 = vsel %vm875, %v1009, -inf
        %1067 = vmax.xlane.f32.xlu0 %v1066
        %v1068 = vpop.xlane.xlu0 %1067
        %v1069 = vsel %vm875, %v1055, -inf
        %1070 = vmax.xlane.f32.xlu0 %v1069
        %v1071 = vpop.xlane.xlu0 %1070
        %v1072 = vsub.f32 %v917, %v1062
        %v1073 = vsub.f32 %v963, %v1065
        %v1074 = vsub.f32 %v1009, %v1068
        %v1075 = vsub.f32 %v1055, %v1071
        %v1076 = vmul.f32 %v1072, 1.442695
        %v1077 = vpow.pop %v1076
        %v1078 = vmul.f32 %v1073, 1.442695
        %v1079 = vpow.pop %v1078
        %v1080 = vmul.f32 %v1074, 1.442695
        %v1081 = vpow.pop %v1080
        %v1082 = vmul.f32 %v1075, 1.442695
        %v1083 = vpow.pop %v1082
        %v1084 = vsel %vm875, %v1077, 0.0
        %1085 = vadd.xlane.f32.xlu0 %v1084
        %v1086 = vpop.xlane.xlu0 %1085
        %v1087 = vsel %vm875, %v1079, 0.0
        %1088 = vadd.xlane.f32.xlu0 %v1087
        %v1089 = vpop.xlane.xlu0 %1088
        %v1090 = vsel %vm875, %v1081, 0.0
        %1091 = vadd.xlane.f32.xlu0 %v1090
        %v1092 = vpop.xlane.xlu0 %1091
        %v1093 = vsel %vm875, %v1083, 0.0
        %1094 = vadd.xlane.f32.xlu0 %v1093
        %v1095 = vpop.xlane.xlu0 %1094
        %v1096 = vrcp.pop %v1086
        %v1097 = vrcp.pop %v1089
        %v1098 = vrcp.pop %v1092
        %v1099 = vrcp.pop %v1095
        %v1100 = vmul.f32 %v1077, %v1096
        %v1101 = vmul.f32 %v1079, %v1097
        %v1102 = vmul.f32 %v1081, %v1098
        %v1103 = vmul.f32 %v1083, %v1099
        %v1104 = vpack.c.bf16 %v1100, %v1100
        %v1105 = vpack.c.bf16 %v1101, %v1101
        %v1106 = vpack.c.bf16 %v1102, %v1102
        %v1107 = vpack.c.bf16 %v1103, %v1103
        %v1109 = vsel %vm875, %v1104, 0
        %vm1111 = vcmask 1043456
        %v1113 = vsel %vm1111, %v865, 0
        %1115 = vmatprep.subr.bf16.mxu0 0
        %1116 = vmatpush1.bf16.msra.mxu0 0
        %1117 = vmatprep.subr.bf16.mxu0 0
        %1118 = vmatpush1.bf16.msra.mxu0 0
        %1119 = vmatprep.subr.bf16.mxu0 0
        %1120 = vmatpush1.bf16.msra.mxu0 0
        %1121 = vmatprep.subr.bf16.mxu0 0
        %1122 = vmatpush1.bf16.msra.mxu0 0
        %1123 = vmatprep.subr.bf16.mxu0 0
        %1124 = vmatpush1.bf16.msra.mxu0 0
        %1125 = vmatprep.subr.bf16.mxu0 0
        %1126 = vmatpush1.bf16.msra.mxu0 0
        %1127 = vmatprep.subr.bf16.mxu0 0
        %1128 = vmatpush1.bf16.msra.mxu0 0
        %1129 = vmatprep.subr.bf16.mxu0 0
        %1130 = vmatpush1.bf16.msra.mxu0 %v1113
        %1131 = vmatprep.subr.bf16.mxu0 0
        %1132 = vmatpush2.bf16.msra.mxu0 0
        %1133 = vmatprep.subr.bf16.mxu0 0
        %1134 = vmatpush2.bf16.msra.mxu0 0
        %1135 = vmatprep.subr.bf16.mxu0 0
        %1136 = vmatpush2.bf16.msra.mxu0 0
        %1137 = vmatprep.subr.bf16.mxu0 0
        %1138 = vmatpush2.bf16.msra.mxu0 0
        %1139 = vmatprep.subr.bf16.mxu0 0
        %1140 = vmatpush2.bf16.msra.mxu0 0
        %1141 = vmatprep.subr.bf16.mxu0 0
        %1142 = vmatpush2.bf16.msra.mxu0 0
        %1143 = vmatprep.subr.bf16.mxu0 0
        %1144 = vmatpush2.bf16.msra.mxu0 0
        %1145 = vmatprep.subr.bf16.mxu0 0
        %1146 = vmatpush2.bf16.msra.mxu0 0
        %1147 = vmatprep.mubr.bf16.mxu0 0
        %1148 = vmatmul.mubr.bf16.gmra.mxu0 %v1109
        %v1149 = vpop.f32.mrf.mxu0
        %v1150 = vadd.f32 0.0, %v1149
        %v1151 = vpop.f32.mrf.mxu0
        %v1152 = vpop.f32.mrf.mxu0
        %v1153 = vpop.f32.mrf.mxu0
        %1154 = vdwg.mxu0
        %v1156 = vsel %vm875, %v1105, 0
        %v1159 = vsel %vm1111, %v866, 0
        %1161 = vmatprep.subr.bf16.mxu0 0
        %1162 = vmatpush1.bf16.msra.mxu0 0
        %1163 = vmatprep.subr.bf16.mxu0 0
        %1164 = vmatpush1.bf16.msra.mxu0 0
        %1165 = vmatprep.subr.bf16.mxu0 0
        %1166 = vmatpush1.bf16.msra.mxu0 0
        %1167 = vmatprep.subr.bf16.mxu0 0
        %1168 = vmatpush1.bf16.msra.mxu0 0
        %1169 = vmatprep.subr.bf16.mxu0 0
        %1170 = vmatpush1.bf16.msra.mxu0 0
        %1171 = vmatprep.subr.bf16.mxu0 0
        %1172 = vmatpush1.bf16.msra.mxu0 0
        %1173 = vmatprep.subr.bf16.mxu0 0
        %1174 = vmatpush1.bf16.msra.mxu0 0
        %1175 = vmatprep.subr.bf16.mxu0 0
        %1176 = vmatpush1.bf16.msra.mxu0 %v1159
        %1177 = vmatprep.subr.bf16.mxu0 0
        %1178 = vmatpush2.bf16.msra.mxu0 0
        %1179 = vmatprep.subr.bf16.mxu0 0
        %1180 = vmatpush2.bf16.msra.mxu0 0
        %1181 = vmatprep.subr.bf16.mxu0 0
        %1182 = vmatpush2.bf16.msra.mxu0 0
        %1183 = vmatprep.subr.bf16.mxu0 0
        %1184 = vmatpush2.bf16.msra.mxu0 0
        %1185 = vmatprep.subr.bf16.mxu0 0
        %1186 = vmatpush2.bf16.msra.mxu0 0
        %1187 = vmatprep.subr.bf16.mxu0 0
        %1188 = vmatpush2.bf16.msra.mxu0 0
        %1189 = vmatprep.subr.bf16.mxu0 0
        %1190 = vmatpush2.bf16.msra.mxu0 0
        %1191 = vmatprep.subr.bf16.mxu0 0
        %1192 = vmatpush2.bf16.msra.mxu0 0
        %1193 = vmatprep.mubr.bf16.mxu0 0
        %1194 = vmatmul.mubr.bf16.gmra.mxu0 %v1156
        %v1195 = vpop.f32.mrf.mxu0
        %v1196 = vadd.f32 0.0, %v1195
        %v1197 = vpop.f32.mrf.mxu0
        %v1198 = vpop.f32.mrf.mxu0
        %v1199 = vpop.f32.mrf.mxu0
        %1200 = vdwg.mxu0
        %v1202 = vsel %vm875, %v1106, 0
        %v1205 = vsel %vm1111, %v867, 0
        %1207 = vmatprep.subr.bf16.mxu0 0
        %1208 = vmatpush1.bf16.msra.mxu0 0
        %1209 = vmatprep.subr.bf16.mxu0 0
        %1210 = vmatpush1.bf16.msra.mxu0 0
        %1211 = vmatprep.subr.bf16.mxu0 0
        %1212 = vmatpush1.bf16.msra.mxu0 0
        %1213 = vmatprep.subr.bf16.mxu0 0
        %1214 = vmatpush1.bf16.msra.mxu0 0
        %1215 = vmatprep.subr.bf16.mxu0 0
        %1216 = vmatpush1.bf16.msra.mxu0 0
        %1217 = vmatprep.subr.bf16.mxu0 0
        %1218 = vmatpush1.bf16.msra.mxu0 0
        %1219 = vmatprep.subr.bf16.mxu0 0
        %1220 = vmatpush1.bf16.msra.mxu0 0
        %1221 = vmatprep.subr.bf16.mxu0 0
        %1222 = vmatpush1.bf16.msra.mxu0 %v1205
        %1223 = vmatprep.subr.bf16.mxu0 0
        %1224 = vmatpush2.bf16.msra.mxu0 0
        %1225 = vmatprep.subr.bf16.mxu0 0
        %1226 = vmatpush2.bf16.msra.mxu0 0
        %1227 = vmatprep.subr.bf16.mxu0 0
        %1228 = vmatpush2.bf16.msra.mxu0 0
        %1229 = vmatprep.subr.bf16.mxu0 0
        %1230 = vmatpush2.bf16.msra.mxu0 0
        %1231 = vmatprep.subr.bf16.mxu0 0
        %1232 = vmatpush2.bf16.msra.mxu0 0
        %1233 = vmatprep.subr.bf16.mxu0 0
        %1234 = vmatpush2.bf16.msra.mxu0 0
        %1235 = vmatprep.subr.bf16.mxu0 0
        %1236 = vmatpush2.bf16.msra.mxu0 0
        %1237 = vmatprep.subr.bf16.mxu0 0
        %1238 = vmatpush2.bf16.msra.mxu0 0
        %1239 = vmatprep.mubr.bf16.mxu0 0
        %1240 = vmatmul.mubr.bf16.gmra.mxu0 %v1202
        %v1241 = vpop.f32.mrf.mxu0
        %v1242 = vadd.f32 0.0, %v1241
        %v1243 = vpop.f32.mrf.mxu0
        %v1244 = vpop.f32.mrf.mxu0
        %v1245 = vpop.f32.mrf.mxu0
        %1246 = vdwg.mxu0
        %v1248 = vsel %vm875, %v1107, 0
        %v1251 = vsel %vm1111, %v868, 0
        %1253 = vmatprep.subr.bf16.mxu0 0
        %1254 = vmatpush1.bf16.msra.mxu0 0
        %1255 = vmatprep.subr.bf16.mxu0 0
        %1256 = vmatpush1.bf16.msra.mxu0 0
        %1257 = vmatprep.subr.bf16.mxu0 0
        %1258 = vmatpush1.bf16.msra.mxu0 0
        %1259 = vmatprep.subr.bf16.mxu0 0
        %1260 = vmatpush1.bf16.msra.mxu0 0
        %1261 = vmatprep.subr.bf16.mxu0 0
        %1262 = vmatpush1.bf16.msra.mxu0 0
        %1263 = vmatprep.subr.bf16.mxu0 0
        %1264 = vmatpush1.bf16.msra.mxu0 0
        %1265 = vmatprep.subr.bf16.mxu0 0
        %1266 = vmatpush1.bf16.msra.mxu0 0
        %1267 = vmatprep.subr.bf16.mxu0 0
        %1268 = vmatpush1.bf16.msra.mxu0 %v1251
        %1269 = vmatprep.subr.bf16.mxu0 0
        %1270 = vmatpush2.bf16.msra.mxu0 0
        %1271 = vmatprep.subr.bf16.mxu0 0
        %1272 = vmatpush2.bf16.msra.mxu0 0
        %1273 = vmatprep.subr.bf16.mxu0 0
        %1274 = vmatpush2.bf16.msra.mxu0 0
        %1275 = vmatprep.subr.bf16.mxu0 0
        %1276 = vmatpush2.bf16.msra.mxu0 0
        %1277 = vmatprep.subr.bf16.mxu0 0
        %1278 = vmatpush2.bf16.msra.mxu0 0
        %1279 = vmatprep.subr.bf16.mxu0 0
        %1280 = vmatpush2.bf16.msra.mxu0 0
        %1281 = vmatprep.subr.bf16.mxu0 0
        %1282 = vmatpush2.bf16.msra.mxu0 0
        %1283 = vmatprep.subr.bf16.mxu0 0
        %1284 = vmatpush2.bf16.msra.mxu0 0
        %1285 = vmatprep.mubr.bf16.mxu0 0
        %1286 = vmatmul.mubr.bf16.gmra.mxu0 %v1248
        %v1287 = vpop.f32.mrf.mxu0
        %v1288 = vadd.f32 0.0, %v1287
        %v1289 = vpop.f32.mrf.mxu0
        %v1290 = vpop.f32.mrf.mxu0
        %v1291 = vpop.f32.mrf.mxu0
        %1292 = vdwg.mxu0
        %v1293 = vcombine.low %v1150, %v1242
        %v1294 = vcombine.high %v1150, %v1242
        %v1296 = vunpack.c.l.s4 1983009808
        %v1297 = vunpack.c.0.s8 %v1296
        %v1298 = vlaneseq
        %v1299 = vshrl.u32 %v1298, 7
        %v1300 = vsub.s32 %v1297, %v1299
        %v1301 = vrot.slane %v1293, %v1300
        %v1303 = vunpack.c.l.s4 1983009808
        %v1304 = vunpack.c.0.s8 %v1303
        %v1305 = vlaneseq
        %v1306 = vshrl.u32 %v1305, 7
        %v1307 = vsub.s32 %v1304, %v1306
        %v1308 = vrot.slane %v1294, %v1307
        %v1309 = vcombine.low %v1196, %v1288
        %v1310 = vcombine.high %v1196, %v1288
        %v1312 = vunpack.c.l.s4 1983009808
        %v1313 = vunpack.c.0.s8 %v1312
        %v1314 = vlaneseq
        %v1315 = vshrl.u32 %v1314, 7
        %v1316 = vsub.s32 %v1313, %v1315
        %v1317 = vrot.slane %v1309, %v1316
        %v1319 = vunpack.c.l.s4 1983009808
        %v1320 = vunpack.c.0.s8 %v1319
        %v1321 = vlaneseq
        %v1322 = vshrl.u32 %v1321, 7
        %v1323 = vsub.s32 %v1320, %v1322
        %v1324 = vrot.slane %v1310, %v1323
        %v1325 = vcombine.low %v1301, %v1317
        %v1326 = vcombine.high %v1301, %v1317
        %v1328 = vunpack.c.l.s4 1934713408
        %v1329 = vunpack.c.0.s8 %v1328
        %v1330 = vlaneseq
        %v1331 = vshrl.u32 %v1330, 7
        %v1332 = vsub.s32 %v1329, %v1331
        %v1333 = vrot.slane %v1325, %v1332
        %v1335 = vunpack.c.l.s4 1934713408
        %v1336 = vunpack.c.0.s8 %v1335
        %v1337 = vlaneseq
        %v1338 = vshrl.u32 %v1337, 7
        %v1339 = vsub.s32 %v1336, %v1338
        %v1340 = vrot.slane %v1326, %v1339
        %v1341 = vcombine.low %v1308, %v1324
        %v1342 = vcombine.high %v1308, %v1324
        %v1344 = vunpack.c.l.s4 1934713408
        %v1345 = vunpack.c.0.s8 %v1344
        %v1346 = vlaneseq
        %v1347 = vshrl.u32 %v1346, 7
        %v1348 = vsub.s32 %v1345, %v1347
        %v1349 = vrot.slane %v1341, %v1348
        %v1351 = vunpack.c.l.s4 1934713408
        %v1352 = vunpack.c.0.s8 %v1351
        %v1353 = vlaneseq
        %v1354 = vshrl.u32 %v1353, 7
        %v1355 = vsub.s32 %v1352, %v1354
        %v1356 = vrot.slane %v1342, %v1355
        %v1357 = vcombine.high %v1333, 0.0
        %v1358 = vcombine.high %v1340, 0.0
        %v1359 = vcombine.high %v1349, 0.0
        %v1360 = vcombine.high %v1356, 0.0
        %v1361 = vcombine.low %v1333, %v1340
        %v1363 = vunpack.c.l.s4 1983009808
        %v1364 = vunpack.c.0.s8 %v1363
        %v1365 = vlaneseq
        %v1366 = vshrl.u32 %v1365, 7
        %v1367 = vsub.s32 %v1364, %v1366
        %v1368 = vrot.slane %v1361, %v1367
        %v1369 = vcombine.low %v1357, %v1358
        %v1371 = vunpack.c.l.s4 1983009808
        %v1372 = vunpack.c.0.s8 %v1371
        %v1373 = vlaneseq
        %v1374 = vshrl.u32 %v1373, 7
        %v1375 = vsub.s32 %v1372, %v1374
        %v1376 = vrot.slane %v1369, %v1375
        %v1377 = vcombine.low %v1349, %v1356
        %v1379 = vunpack.c.l.s4 1983009808
        %v1380 = vunpack.c.0.s8 %v1379
        %v1381 = vlaneseq
        %v1382 = vshrl.u32 %v1381, 7
        %v1383 = vsub.s32 %v1380, %v1382
        %v1384 = vrot.slane %v1377, %v1383
        %v1385 = vcombine.low %v1359, %v1360
        %v1387 = vunpack.c.l.s4 1983009808
        %v1388 = vunpack.c.0.s8 %v1387
        %v1389 = vlaneseq
        %v1390 = vshrl.u32 %v1389, 7
        %v1391 = vsub.s32 %v1388, %v1390
        %v1392 = vrot.slane %v1385, %v1391
        %v1393 = vcombine.low %v1368, %v1376
        %v1394 = vcombine.high %v1368, %v1376
        %v1396 = vunpack.c.l.s4 1934713408
        %v1397 = vunpack.c.0.s8 %v1396
        %v1398 = vlaneseq
        %v1399 = vshrl.u32 %v1398, 7
        %v1400 = vsub.s32 %v1397, %v1399
        %v1401 = vrot.slane %v1393, %v1400
        %v1403 = vunpack.c.l.s4 1934713408
        %v1404 = vunpack.c.0.s8 %v1403
        %v1405 = vlaneseq
        %v1406 = vshrl.u32 %v1405, 7
        %v1407 = vsub.s32 %v1404, %v1406
        %v1408 = vrot.slane %v1394, %v1407
        %v1409 = vcombine.low %v1384, %v1392
        %v1410 = vcombine.high %v1384, %v1392
        %v1412 = vunpack.c.l.s4 1934713408
        %v1413 = vunpack.c.0.s8 %v1412
        %v1414 = vlaneseq
        %v1415 = vshrl.u32 %v1414, 7
        %v1416 = vsub.s32 %v1413, %v1415
        %v1417 = vrot.slane %v1409, %v1416
        %v1419 = vunpack.c.l.s4 1934713408
        %v1420 = vunpack.c.0.s8 %v1419
        %v1421 = vlaneseq
        %v1422 = vshrl.u32 %v1421, 7
        %v1423 = vsub.s32 %v1420, %v1422
        %v1424 = vrot.slane %v1410, %v1423
        %v1425 = vcombine.low %v1401, %v1417
        %v1426 = vcombine.high %v1401, %v1417
        %v1427 = vcombine.low %v1408, %v1424
        %v1428 = vcombine.high %v1408, %v1424
        %1430 = vrot.lane.b32.xlu0 %v1426, 8
        %v1431 = vpop.permute.xlu0 %1430
        %1434 = vrot.lane.b32.xlu0 %v1427, 16
        %v1435 = vpop.permute.xlu0 %1434
        %1438 = vrot.lane.b32.xlu0 %v1428, 24
        %v1439 = vpop.permute.xlu0 %1438
        %v1441 = vsel %vm875, %v1425, %v1431
        %vm1442 = vcmask 130048
        %v1443 = vsel %vm1442, %v1441, %v1435
        %vm1444 = vcmask 195584
        %v1445 = vsel %vm1444, %v1443, %v1439
        %v1446 = vpack.c.bf16 %v1445, %v1445
        %v1448 = vlaneseq
        %v1449 = vshrl.u32 %v1448, 7
        %v1450 = vsub.s32 0, %v1449
        %v1451 = vrot.slane %v404, %v1450
        %v1457 = vunpack.c.l.b16 %v400
        %v1458 = vunpack.c.l.b16 %v401
        %v1459 = vunpack.c.l.b16 %v402
        %v1460 = vunpack.c.l.b16 %v403
        %v1461 = vpack.c.b16 %v1458, %v1457
        %v1462 = vpack.c.b16 %v1460, %v1459
        %v1466 = vsel %vm356, %v1446, 0
        %1468 = vmatprep.subr.bf16.mxu0 0
        %1469 = vmatpush1.bf16.msra.mxu0 0
        %1470 = vmatprep.subr.bf16.mxu0 0
        %1471 = vmatpush1.bf16.msra.mxu0 0
        %1472 = vmatprep.subr.bf16.mxu0 0
        %1473 = vmatpush1.bf16.msra.mxu0 0
        %1474 = vmatprep.subr.bf16.mxu0 0
        %1475 = vmatpush1.bf16.msra.mxu0 0
        %1476 = vmatprep.subr.bf16.mxu0 0
        %1477 = vmatpush1.bf16.msra.mxu0 0
        %1478 = vmatprep.subr.bf16.mxu0 0
        %1479 = vmatpush1.bf16.msra.mxu0 0
        %1480 = vmatprep.subr.bf16.mxu0 0
        %1481 = vmatpush1.bf16.msra.mxu0 %v1462
        %1482 = vmatprep.subr.bf16.mxu0 0
        %1483 = vmatpush1.bf16.msra.mxu0 %v1461
        %1484 = vmatprep.subr.bf16.mxu0 0
        %1485 = vmatpush2.bf16.msra.mxu0 0
        %1486 = vmatprep.subr.bf16.mxu0 0
        %1487 = vmatpush2.bf16.msra.mxu0 0
        %1488 = vmatprep.subr.bf16.mxu0 0
        %1489 = vmatpush2.bf16.msra.mxu0 0
        %1490 = vmatprep.subr.bf16.mxu0 0
        %1491 = vmatpush2.bf16.msra.mxu0 0
        %1492 = vmatprep.subr.bf16.mxu0 0
        %1493 = vmatpush2.bf16.msra.mxu0 0
        %1494 = vmatprep.subr.bf16.mxu0 0
        %1495 = vmatpush2.bf16.msra.mxu0 0
        %1496 = vmatprep.subr.bf16.mxu0 0
        %1497 = vmatpush2.bf16.msra.mxu0 0
        %1498 = vmatprep.subr.bf16.mxu0 0
        %1499 = vmatpush2.bf16.msra.mxu0 0
        %1500 = vmatprep.mubr.bf16.mxu0 0
        %1501 = vmatmul.mubr.bf16.gmra.mxu0 %v1466
        %v1502 = vpop.f32.mrf.mxu0
        %v1503 = vadd.f32 %v1451, %v1502
        %v1504 = vpop.f32.mrf.mxu0
        %v1505 = vpop.f32.mrf.mxu0
        %v1506 = vpop.f32.mrf.mxu0
        %1507 = vdwg.mxu0
        %1508 = vst.msk [vmem:[%s329] sm:$0xff] %vm356, %v1503
        %s1509 = sand.u32 %s171, 1
        %s1510 = scalar_lea.sflag [#allocation4], %s1509
        %s1511 = sand.u32 %s171, 1
        %s1512 = smul.addr %s1511, 8
        %s1513 = scalar_lea.vmem [#allocation10], %s1512
        // Predicated region
        $region61: #{tpu_custom_call.1} parent=43 // pred_check
          %p1514 = pneg %p181
        $region62: #{tpu_custom_call.1} parent=43 // pred_check_branch
          %1516 = sbr.rel (%p1514) target = $region64
        $region63: #{tpu_custom_call.1} parent=43 // pred_region
          %s1518 = ssub.s32 128, 128
          %1519 = vsyncadd %s1510, %s1518
          %s1520 = smul.addr %s27, 128
          %s1521 = scalar_lea.hbm %s6, %s1520
          %s1523 = sshll.u32 %s1513, 4
          %s1524 = int_to_ptr.vmem [resolvable:$true] %s1523
          %1526 = dma.vmem_to_hbm [thread:$0]  %s1524, 128, %s1521, %s1510
        $region64: #{tpu_custom_call.1} parent=43 // pred_fallthru
          _
      $region44: #{tpu_custom_call.1} parent=5 // pred_fallthru
        _
      %p1527 = scmp.le.s32.totalorder 2, %s22
      // Predicated region
      $region65: #{tpu_custom_call.1} parent=5 // pred_check
        %p1528 = pneg %p1527
      $region66: #{tpu_custom_call.1} parent=5 // pred_check_branch
        %1530 = sbr.rel (%p1528) target = $region68
      $region67: #{tpu_custom_call.1} parent=5 // pred_region
        %s1531 = ssub.s32 %s22, 2
        // Predicated region
        $region69: #{tpu_custom_call.1} parent=67 // pred_check
          %p1532 = pneg %p187
        $region70: #{tpu_custom_call.1} parent=67 // pred_check_branch
          %1534 = sbr.rel (%p1532) target = $region72
        $region71: #{tpu_custom_call.1} parent=67 // pred_region
          %s1535 = sand.u32 %s172, 1
          %s1536 = scalar_lea.sflag [#allocation4], %s1535
          %s1537 = sand.u32 %s172, 1
          %s1538 = smul.addr %s1537, 8
          %s1539 = scalar_lea.vmem [#allocation10], %s1538
          %1540 = dma.done %s1536, 128
        $region72: #{tpu_custom_call.1} parent=67 // pred_fallthru
          _
      $region68: #{tpu_custom_call.1} parent=5 // pred_fallthru
        _
    $region6: #{tpu_custom_call.1} parent=1 // loop_footer
      %s26 = sadd.s32 1, %s22
    $region7: #{tpu_custom_call.1} parent=1 // loop_footer_branch
      %21 = sbr.rel target = $region3
    $region8: #{tpu_custom_call.1} parent=1 // loop_exit
      _
    %1541 = vsyncpa [#allocation3], 1
    %s1542 = scalar_lea.sflag [#allocation3], 1
    %1543 = vsyncpa %s1542, 1
    %1544 = vsyncpa [#allocation6], 1
    %s1545 = scalar_lea.sflag [#allocation6], 1
    %1546 = vsyncpa %s1545, 1
    %1547 = vsyncpa [#allocation9], 1
    %1548 = vsyncpa [#allocation4], 1
    %s1549 = scalar_lea.sflag [#allocation4], 1
    %1550 = vsyncpa %s1549, 1

</llo_original>
